<compile_context>
chip_gen: v6e
topology: v6e:2x2x1
jax: 0.10.0
libtpu: 0.0.40
codegen_flags: <defaults>
</compile_context>

<pallas_src>
from functools import partial

import jax
import jax.numpy as jnp
from jax.experimental import pallas as pl
from jax.experimental.pallas import tpu as pltpu


def _attend_kernel(q_ref, k_ref, v_ref, o_ref, m_sc, l_sc, acc_sc, *, scale):
    kv = pl.program_id(2)

    @pl.when(kv == 0)
    def _():
        m_sc[...] = jnp.full_like(m_sc, -jnp.inf)
        l_sc[...] = jnp.zeros_like(l_sc)
        acc_sc[...] = jnp.zeros_like(acc_sc)

    q = q_ref[0]                         # (tq, D)
    k = k_ref[0]                         # (tk, D)
    v = v_ref[0]                         # (tk, D)

    # scores: one MXU push with K = head_dim, lane axis = tk (128-wide)
    s = jax.lax.dot_general(
        q, k, (((1,), (1,)), ((), ())),
        preferred_element_type=jnp.float32) * scale          # (tq, tk)

    m_prev = m_sc[...]                                        # (tq, 1)
    m_new = jnp.maximum(m_prev, s.max(axis=-1, keepdims=True))
    alpha = jnp.exp(m_prev - m_new)                           # rescale factor
    p = jnp.exp(s - m_new)                                    # (tq, tk)

    l_sc[...] = alpha * l_sc[...] + p.sum(axis=-1, keepdims=True)
    acc_sc[...] = alpha * acc_sc[...] + jnp.dot(
        p.astype(v.dtype), v, preferred_element_type=jnp.float32)
    m_sc[...] = m_new

    @pl.when(kv == pl.num_programs(2) - 1)
    def _():
        o_ref[0] = (acc_sc[...] / l_sc[...]).astype(o_ref.dtype)


def attend_forward(q, k, v, mask=None, *, tq=128, tk=128):
    """Pallas TPU implementation of Attend.forward (non-flash path, eval mode)."""
    assert mask is None, "non-flash Attend.forward asserts mask is None"
    B, H, Nq, D = q.shape
    Nk = k.shape[2]
    scale = float(D) ** -0.5

    tq = min(tq, Nq)
    tk = min(tk, Nk)
    assert Nq % tq == 0 and Nk % tk == 0, "seq lengths must tile evenly"

    qf = q.reshape(B * H, Nq, D)
    kf = k.reshape(B * H, Nk, D)
    vf = v.reshape(B * H, Nk, D)

    grid = (B * H, Nq // tq, Nk // tk)

    out = pl.pallas_call(
        partial(_attend_kernel, scale=scale),
        out_shape=jax.ShapeDtypeStruct((B * H, Nq, D), q.dtype),
        grid_spec=pltpu.PrefetchScalarGridSpec(
            num_scalar_prefetch=0,
            grid=grid,
            in_specs=[
                pl.BlockSpec((1, tq, D), lambda b, qi, ki: (b, qi, 0)),
                pl.BlockSpec((1, tk, D), lambda b, qi, ki: (b, ki, 0)),
                pl.BlockSpec((1, tk, D), lambda b, qi, ki: (b, ki, 0)),
            ],
            out_specs=pl.BlockSpec((1, tq, D), lambda b, qi, ki: (b, qi, 0)),
            scratch_shapes=[
                pltpu.VMEM((tq, 1), jnp.float32),   # running max
                pltpu.VMEM((tq, 1), jnp.float32),   # running denom
                pltpu.VMEM((tq, D), jnp.float32),   # output accumulator
            ],
        ),
        compiler_params=pltpu.CompilerParams(
            dimension_semantics=("parallel", "parallel", "arbitrary")),
    )(qf, kf, vf)

    return out.reshape(B, H, Nq, D)


def ref_attend(q, k, v):
    # Pure-JAX reference mirroring the PyTorch module (non-flash path, eval).
    scale = q.shape[-1] ** -0.5
    sim = jnp.einsum('bhid,bhjd->bhij', q, k) * scale
    attn = jax.nn.softmax(sim, axis=-1)
    return jnp.einsum('bhij,bhjd->bhid', attn, v)


if __name__ == "__main__":
    # Attend() with dropout=0.0, flash=False; q,k,v: (batch, heads, seq, head_dim)
    B, H, N, D = 2, 4, 128, 64

    key = jax.random.PRNGKey(0)
    kq, kk, kv = jax.random.split(key, 3)
    q = jax.random.normal(kq, (B, H, N, D), jnp.float32)
    k = jax.random.normal(kk, (B, H, N, D), jnp.float32)
    v = jax.random.normal(kv, (B, H, N, D), jnp.float32)

    out = attend_forward(q, k, v)
    out = jax.block_until_ready(out)
    assert out.shape == (B, H, N, D), out.shape

    ref = ref_attend(q, k, v)
    if not jnp.allclose(out, ref, rtol=1e-3, atol=1e-3):
        max_err = float(jnp.max(jnp.abs(out - ref)))
        raise AssertionError(f"kernel/reference mismatch, max abs err = {max_err}")

    print("KERNEL_OK")
</pallas_src>

<mosaic_0001>
module attributes {stable_mosaic.version = 11 : i64} {
  func.func @_attend_kernel(%arg0: i32, %arg1: i32, %arg2: i32, %arg3: memref<1x128x64xf32, #tpu.memory_space<vmem>>, %arg4: memref<1x128x64xf32, #tpu.memory_space<vmem>>, %arg5: memref<1x128x64xf32, #tpu.memory_space<vmem>>, %arg6: memref<1x128x64xf32, #tpu.memory_space<vmem>>, %arg7: memref<128x1xf32, #tpu.memory_space<vmem>>, %arg8: memref<128x1xf32, #tpu.memory_space<vmem>>, %arg9: memref<128x64xf32, #tpu.memory_space<vmem>>) attributes {dimension_semantics = [#tpu.dimension_semantics<parallel>, #tpu.dimension_semantics<parallel>, #tpu.dimension_semantics<arbitrary>], iteration_bounds = array<i64: 8, 1, 1>, scalar_prefetch = 0 : i64, scratch_operands = 3 : i64, tpu.core_type = #tpu.core_type<tc>, window_params = [{transform_indices = @transform_0, window_bounds = array<i64: 1, 128, 64>}, {transform_indices = @transform_1, window_bounds = array<i64: 1, 128, 64>}, {transform_indices = @transform_2, window_bounds = array<i64: 1, 128, 64>}, {transform_indices = @transform_3, window_bounds = array<i64: 1, 128, 64>}]} {
    %c0_i32 = arith.constant 0 : i32
    %0 = arith.cmpi eq, %arg2, %c0_i32 : i32
    %1 = arith.extui %0 : i1 to i32
    %c0_i32_0 = arith.constant 0 : i32
    %2 = arith.cmpi ne, %1, %c0_i32_0 : i32
    scf.if %2 {
      %cst_27 = arith.constant 0xFF800000 : f32
      %37 = vector.broadcast %cst_27 : f32 to vector<128x1xf32>
      %c0_28 = arith.constant 0 : index
      %c0_29 = arith.constant 0 : index
      %38 = vector.load %arg7[%c0_28, %c0_29] : memref<128x1xf32, #tpu.memory_space<vmem>>, vector<128x1xf32>
      tpu.vector_store %arg7[%c0_28, %c0_29], %37 {strides = array<i32>} : memref<128x1xf32, #tpu.memory_space<vmem>>, vector<128x1xf32>,
      %cst_30 = arith.constant 0.000000e+00 : f32
      %39 = vector.broadcast %cst_30 : f32 to vector<128x1xf32>
      %c0_31 = arith.constant 0 : index
      %c0_32 = arith.constant 0 : index
      %40 = vector.load %arg8[%c0_31, %c0_32] : memref<128x1xf32, #tpu.memory_space<vmem>>, vector<128x1xf32>
      tpu.vector_store %arg8[%c0_31, %c0_32], %39 {strides = array<i32>} : memref<128x1xf32, #tpu.memory_space<vmem>>, vector<128x1xf32>,
      %cst_33 = arith.constant 0.000000e+00 : f32
      %41 = vector.broadcast %cst_33 : f32 to vector<128x64xf32>
      %c0_34 = arith.constant 0 : index
      %c0_35 = arith.constant 0 : index
      %42 = vector.load %arg9[%c0_34, %c0_35] : memref<128x64xf32, #tpu.memory_space<vmem>>, vector<128x64xf32>
      tpu.vector_store %arg9[%c0_34, %c0_35], %41 {strides = array<i32>} : memref<128x64xf32, #tpu.memory_space<vmem>>, vector<128x64xf32>,
    } else {
    }
    %c0 = arith.constant 0 : index
    %c0_1 = arith.constant 0 : index
    %c0_2 = arith.constant 0 : index
    %3 = vector.load %arg3[%c0, %c0_1, %c0_2] : memref<1x128x64xf32, #tpu.memory_space<vmem>>, vector<1x128x64xf32>
    %4 = vector.shape_cast %3 : vector<1x128x64xf32> to vector<128x64xf32>
    %c0_3 = arith.constant 0 : index
    %c0_4 = arith.constant 0 : index
    %c0_5 = arith.constant 0 : index
    %5 = vector.load %arg4[%c0_3, %c0_4, %c0_5] : memref<1x128x64xf32, #tpu.memory_space<vmem>>, vector<1x128x64xf32>
    %6 = vector.shape_cast %5 : vector<1x128x64xf32> to vector<128x64xf32>
    %c0_6 = arith.constant 0 : index
    %c0_7 = arith.constant 0 : index
    %c0_8 = arith.constant 0 : index
    %7 = vector.load %arg5[%c0_6, %c0_7, %c0_8] : memref<1x128x64xf32, #tpu.memory_space<vmem>>, vector<1x128x64xf32>
    %8 = vector.shape_cast %7 : vector<1x128x64xf32> to vector<128x64xf32>
    %cst = arith.constant dense<0.000000e+00> : vector<128x128xf32>
    %9 = tpu.matmul %4, %6, %cst {dimension_numbers = #tpu.dot_dimension_numbers<[1], [1], [0], [0], [0, 0, 1, 0], [], []>} : vector<128x64xf32>, vector<128x64xf32>, vector<128x128xf32> -> vector<128x128xf32>
    %cst_9 = arith.constant 1.250000e-01 : f32
    %10 = vector.broadcast %cst_9 : f32 to vector<128x128xf32>
    %11 = arith.mulf %9, %10 : vector<128x128xf32>
    %c0_10 = arith.constant 0 : index
    %c0_11 = arith.constant 0 : index
    %12 = vector.load %arg7[%c0_10, %c0_11] : memref<128x1xf32, #tpu.memory_space<vmem>>, vector<128x1xf32>
    %cst_12 = arith.constant dense<0xFF800000> : vector<128xf32>
    %13 = vector.multi_reduction <maximumf>, %11, %cst_12 [1] : vector<128x128xf32> to vector<128xf32>
    %14 = vector.shape_cast %13 : vector<128xf32> to vector<128x1xf32>
    %15 = arith.maximumf %12, %14 : vector<128x1xf32>
    %16 = arith.subf %12, %15 : vector<128x1xf32>
    %17 = math.exp %16 : vector<128x1xf32>
    %18 = vector.broadcast %15 : vector<128x1xf32> to vector<128x128xf32>
    %19 = arith.subf %11, %18 : vector<128x128xf32>
    %20 = math.exp %19 : vector<128x128xf32>
    %c0_13 = arith.constant 0 : index
    %c0_14 = arith.constant 0 : index
    %21 = vector.load %arg8[%c0_13, %c0_14] : memref<128x1xf32, #tpu.memory_space<vmem>>, vector<128x1xf32>
    %22 = arith.mulf %17, %21 : vector<128x1xf32>
    %cst_15 = arith.constant dense<0.000000e+00> : vector<128xf32>
    %23 = vector.multi_reduction <add>, %20, %cst_15 [1] : vector<128x128xf32> to vector<128xf32>
    %24 = vector.shape_cast %23 : vector<128xf32> to vector<128x1xf32>
    %25 = arith.addf %22, %24 : vector<128x1xf32>
    %c0_16 = arith.constant 0 : index
    %c0_17 = arith.constant 0 : index
    %26 = vector.load %arg8[%c0_16, %c0_17] : memref<128x1xf32, #tpu.memory_space<vmem>>, vector<128x1xf32>
    tpu.vector_store %arg8[%c0_16, %c0_17], %25 {strides = array<i32>} : memref<128x1xf32, #tpu.memory_space<vmem>>, vector<128x1xf32>,
    %c0_18 = arith.constant 0 : index
    %c0_19 = arith.constant 0 : index
    %27 = vector.load %arg9[%c0_18, %c0_19] : memref<128x64xf32, #tpu.memory_space<vmem>>, vector<128x64xf32>
    %28 = vector.broadcast %17 : vector<128x1xf32> to vector<128x64xf32>
    %29 = arith.mulf %28, %27 : vector<128x64xf32>
    %cst_20 = arith.constant dense<0.000000e+00> : vector<128x64xf32>
    %30 = tpu.matmul %20, %8, %cst_20 {dimension_numbers = #tpu.dot_dimension_numbers<[1], [0], [0], [1], [0, 0, 1, 1], [], []>} : vector<128x128xf32>, vector<128x64xf32>, vector<128x64xf32> -> vector<128x64xf32>
    %31 = arith.addf %29, %30 : vector<128x64xf32>
    %c0_21 = arith.constant 0 : index
    %c0_22 = arith.constant 0 : index
    %32 = vector.load %arg9[%c0_21, %c0_22] : memref<128x64xf32, #tpu.memory_space<vmem>>, vector<128x64xf32>
    tpu.vector_store %arg9[%c0_21, %c0_22], %31 {strides = array<i32>} : memref<128x64xf32, #tpu.memory_space<vmem>>, vector<128x64xf32>,
    %c0_23 = arith.constant 0 : index
    %c0_24 = arith.constant 0 : index
    %33 = vector.load %arg7[%c0_23, %c0_24] : memref<128x1xf32, #tpu.memory_space<vmem>>, vector<128x1xf32>
    tpu.vector_store %arg7[%c0_23, %c0_24], %15 {strides = array<i32>} : memref<128x1xf32, #tpu.memory_space<vmem>>, vector<128x1xf32>,
    %c0_i32_25 = arith.constant 0 : i32
    %34 = arith.cmpi eq, %arg2, %c0_i32_25 : i32
    %35 = arith.extui %34 : i1 to i32
    %c0_i32_26 = arith.constant 0 : i32
    %36 = arith.cmpi ne, %35, %c0_i32_26 : i32
    scf.if %36 {
      %c0_27 = arith.constant 0 : index
      %c0_28 = arith.constant 0 : index
      %37 = vector.load %arg9[%c0_27, %c0_28] : memref<128x64xf32, #tpu.memory_space<vmem>>, vector<128x64xf32>
      %c0_29 = arith.constant 0 : index
      %c0_30 = arith.constant 0 : index
      %38 = vector.load %arg8[%c0_29, %c0_30] : memref<128x1xf32, #tpu.memory_space<vmem>>, vector<128x1xf32>
      %39 = vector.broadcast %38 : vector<128x1xf32> to vector<128x64xf32>
      %40 = arith.divf %37, %39 : vector<128x64xf32>
      %c0_31 = arith.constant 0 : index
      %c0_32 = arith.constant 0 : index
      %c0_33 = arith.constant 0 : index
      %41 = vector.load %arg6[%c0_31, %c0_32, %c0_33] : memref<1x128x64xf32, #tpu.memory_space<vmem>>, vector<1x128x64xf32>
      %42 = vector.shape_cast %41 : vector<1x128x64xf32> to vector<128x64xf32>
      %43 = vector.shape_cast %40 : vector<128x64xf32> to vector<1x128x64xf32>
      tpu.vector_store %arg6[%c0_31, %c0_32, %c0_33], %43 {strides = array<i32>} : memref<1x128x64xf32, #tpu.memory_space<vmem>>, vector<1x128x64xf32>,
    } else {
    }
    return
  }
  func.func @transform_0(%arg0: i32, %arg1: i32, %arg2: i32) -> (i32, i32, i32) {
    %c0_i32 = arith.constant 0 : i32
    %c0_i32_0 = arith.constant 0 : i32
    return %arg0, %arg1, %c0_i32 : i32, i32, i32
  }
  func.func @transform_1(%arg0: i32, %arg1: i32, %arg2: i32) -> (i32, i32, i32) {
    %c0_i32 = arith.constant 0 : i32
    %c0_i32_0 = arith.constant 0 : i32
    return %arg0, %arg2, %c0_i32 : i32, i32, i32
  }
  func.func @transform_2(%arg0: i32, %arg1: i32, %arg2: i32) -> (i32, i32, i32) {
    %c0_i32 = arith.constant 0 : i32
    %c0_i32_0 = arith.constant 0 : i32
    return %arg0, %arg2, %c0_i32 : i32, i32, i32
  }
  func.func @transform_3(%arg0: i32, %arg1: i32, %arg2: i32) -> (i32, i32, i32) {
    %c0_i32 = arith.constant 0 : i32
    %c0_i32_0 = arith.constant 0 : i32
    return %arg0, %arg1, %c0_i32 : i32, i32, i32
  }
}

</mosaic_0001>

<llo_original>
// kernel: tpu_custom_call.1
$region0: #{tpu_custom_call.1}
  #allocation0 [shape = 'u32[]', space=smem, size = 0x4, offset = 0x4, fixed_abs, tag = 'smem constant byte address 0x4 - core index']
  #allocation1 [shape = 'u32[144,128]{1,0:T(1,128)}', space=vmem, size = 0x12000, scoped, tag = 'internal scratch']
  #allocation2 [shape = 'f32[128,1]{1,0:T(8,128)}', space=vmem, size = 0x10000, scoped, tag = 'scratch operand']
  #allocation3 [shape = 'f32[128,1]{1,0:T(8,128)}', space=vmem, size = 0x10000, scoped, tag = 'scratch operand']
  #allocation4 [shape = 'f32[128,64]{1,0:T(8,128)}', space=vmem, size = 0x10000, scoped, tag = 'scratch operand']
  %s0 = inlined_call_operand.vmem [shape: f32[8,128,64], index: 0, kind: input, shape index: {}]
  %s1 = inlined_call_operand.vmem [shape: f32[8,128,64], index: 1, kind: input, shape index: {}]
  %s2 = inlined_call_operand.vmem [shape: f32[8,128,64], index: 2, kind: input, shape index: {}]
  %s3 = inlined_call_operand.vmem [shape: f32[8,128,64], index: 3, kind: output, shape index: {}]
  %s4 = sld [smem:[#allocation0]]
  $region53: #{tpu_custom_call.1} parent=0
    _
  %s6 = ssub.s32 1, %s4
  %s7 = scalar_select 0, %s6, %s4
  loop: start=0, step=1, limit=10
  $region2: #{tpu_custom_call.1} parent=0 // loop_pre_header
    _
  $region3: #{tpu_custom_call.1} parent=0 // loop_header
    %s9 = sphi 0, %s13
    %p10 = scmp.ge.s32.totalorder %s9, 10
    %s16 = sphi 0, %s35
    %s17 = sphi 0, %s31
    %s18 = sphi 0, %s27
    %s19 = sphi 0, %s16
    %s20 = sphi 0, %s17
    %s21 = sphi 0, %s18
    %s22 = sphi 0, %s19
    %s23 = sphi 0, %s20
    %s24 = sphi 0, %s21
    %s40 = sphi 0, %s42
    %s43 = sphi 0, %s40
    %s44 = sphi 0, %s43
    %s60 = sphi 0, %s44
    %s68 = sphi 0, %s70
    %s71 = sphi 0, %s68
    %s72 = sphi 0, %s71
    %s88 = sphi 0, %s72
    %s96 = sphi 0, %s98
    %s99 = sphi 0, %s96
    %s100 = sphi 0, %s99
    %s116 = sphi 0, %s100
    %s124 = sphi 0, %s126
    %s127 = sphi 0, %s124
    %s128 = sphi 0, %s127
    %s144 = sphi 0, %s128
  $region4: #{tpu_custom_call.1} parent=0 // loop_header_branch
    %12 = sbr.rel (%p10) target = $region8
  $region5: #{tpu_custom_call.1} parent=0 // loop_body
    %s14 = ssub.s32 %s9, 1
    %s15 = ssub.s32 %s9, 2
    %s25 = sadd.s32 1, %s18
    %p26 = scmp.ge.s32.totalorder %s25, 1
    %s27 = scalar_select %p26, 0, %s25
    %s28 = sadd.s32 1, %s17
    %s29 = scalar_select %p26, %s28, %s17
    %p30 = scmp.ge.s32.totalorder %s29, 1
    %s31 = scalar_select %p30, 0, %s29
    %s32 = sadd.s32 1, %s16
    %s33 = scalar_select %p30, %s32, %s16
    %p34 = scmp.ge.s32.totalorder %s33, 8
    %s35 = scalar_select %p34, 0, %s33
    %s36 = ssub.s32 %s16, %s35
    %s37 = ssub.s32 %s17, %s31
    %s38 = sor.u32 %s36, %s37
    %p39 = scmp.eq.s32.totalorder %s38, 0
    %s41 = sadd.s32 %s40, 1
    %s42 = scalar_select %p39, %s40, %s41
    %p45 = pneg %p39
    %p46 = scmp.eq.s32.totalorder %s9, 7
    %p47 = por %p45, %p46
    %p48 = scmp.ne.s32.totalorder %s40, %s43
    %p49 = scmp.eq.s32.totalorder %s9, 0
    %p50 = por %p48, %p49
    %p51 = scmp.ne.s32.totalorder %s40, %s43
    %p52 = scmp.eq.s32.totalorder %s14, 7
    %p53 = por %p51, %p52
    %p54 = scmp.ne.s32.totalorder %s43, %s44
    %p55 = scmp.eq.s32.totalorder %s14, 0
    %p56 = por %p54, %p55
    %p57 = scmp.ne.s32.totalorder %s43, %s44
    %p58 = scmp.eq.s32.totalorder %s15, 7
    %p59 = por %p57, %p58
    %p61 = scmp.ne.s32.totalorder %s44, %s60
    %p62 = scmp.eq.s32.totalorder %s15, 0
    %p63 = por %p61, %p62
    %s64 = ssub.s32 %s16, %s35
    %s65 = ssub.s32 %s18, %s27
    %s66 = sor.u32 %s64, %s65
    %p67 = scmp.eq.s32.totalorder %s66, 0
    %s69 = sadd.s32 %s68, 1
    %s70 = scalar_select %p67, %s68, %s69
    %p73 = pneg %p67
    %p74 = scmp.eq.s32.totalorder %s9, 7
    %p75 = por %p73, %p74
    %p76 = scmp.ne.s32.totalorder %s68, %s71
    %p77 = scmp.eq.s32.totalorder %s9, 0
    %p78 = por %p76, %p77
    %p79 = scmp.ne.s32.totalorder %s68, %s71
    %p80 = scmp.eq.s32.totalorder %s14, 7
    %p81 = por %p79, %p80
    %p82 = scmp.ne.s32.totalorder %s71, %s72
    %p83 = scmp.eq.s32.totalorder %s14, 0
    %p84 = por %p82, %p83
    %p85 = scmp.ne.s32.totalorder %s71, %s72
    %p86 = scmp.eq.s32.totalorder %s15, 7
    %p87 = por %p85, %p86
    %p89 = scmp.ne.s32.totalorder %s72, %s88
    %p90 = scmp.eq.s32.totalorder %s15, 0
    %p91 = por %p89, %p90
    %s92 = ssub.s32 %s16, %s35
    %s93 = ssub.s32 %s18, %s27
    %s94 = sor.u32 %s92, %s93
    %p95 = scmp.eq.s32.totalorder %s94, 0
    %s97 = sadd.s32 %s96, 1
    %s98 = scalar_select %p95, %s96, %s97
    %p101 = pneg %p95
    %p102 = scmp.eq.s32.totalorder %s9, 7
    %p103 = por %p101, %p102
    %p104 = scmp.ne.s32.totalorder %s96, %s99
    %p105 = scmp.eq.s32.totalorder %s9, 0
    %p106 = por %p104, %p105
    %p107 = scmp.ne.s32.totalorder %s96, %s99
    %p108 = scmp.eq.s32.totalorder %s14, 7
    %p109 = por %p107, %p108
    %p110 = scmp.ne.s32.totalorder %s99, %s100
    %p111 = scmp.eq.s32.totalorder %s14, 0
    %p112 = por %p110, %p111
    %p113 = scmp.ne.s32.totalorder %s99, %s100
    %p114 = scmp.eq.s32.totalorder %s15, 7
    %p115 = por %p113, %p114
    %p117 = scmp.ne.s32.totalorder %s100, %s116
    %p118 = scmp.eq.s32.totalorder %s15, 0
    %p119 = por %p117, %p118
    %s120 = ssub.s32 %s16, %s35
    %s121 = ssub.s32 %s17, %s31
    %s122 = sor.u32 %s120, %s121
    %p123 = scmp.eq.s32.totalorder %s122, 0
    %s125 = sadd.s32 %s124, 1
    %s126 = scalar_select %p123, %s124, %s125
    %p129 = pneg %p123
    %p130 = scmp.eq.s32.totalorder %s9, 7
    %p131 = por %p129, %p130
    %p132 = scmp.ne.s32.totalorder %s124, %s127
    %p133 = scmp.eq.s32.totalorder %s9, 0
    %p134 = por %p132, %p133
    %p135 = scmp.ne.s32.totalorder %s124, %s127
    %p136 = scmp.eq.s32.totalorder %s14, 7
    %p137 = por %p135, %p136
    %p138 = scmp.ne.s32.totalorder %s127, %s128
    %p139 = scmp.eq.s32.totalorder %s14, 0
    %p140 = por %p138, %p139
    %p141 = scmp.ne.s32.totalorder %s127, %s128
    %p142 = scmp.eq.s32.totalorder %s15, 7
    %p143 = por %p141, %p142
    %p145 = scmp.ne.s32.totalorder %s128, %s144
    %p146 = scmp.eq.s32.totalorder %s15, 0
    %p147 = por %p145, %p146
    %p148 = scmp.le.s32.totalorder 1, %s9
    %p149 = scmp.lt.s32.totalorder %s9, 9
    %p150 = pnand %p148, %p149
    %p151 = pneg %p150
    // Predicated region
    $region9: #{tpu_custom_call.1} parent=5 // pred_check
      _
    $region10: #{tpu_custom_call.1} parent=5 // pred_check_branch
      %153 = sbr.rel (%p150) target = $region12
    $region11: #{tpu_custom_call.1} parent=5 // pred_region
      %s154 = ssub.s32 %s9, 1
    $region12: #{tpu_custom_call.1} parent=5 // pred_fallthru
      _
    %p155 = scmp.lt.s32.totalorder %s9, 8
    // Predicated region
    $region13: #{tpu_custom_call.1} parent=5 // pred_check
      %p156 = pneg %p155
    $region14: #{tpu_custom_call.1} parent=5 // pred_check_branch
      %158 = sbr.rel (%p156) target = $region16
    $region15: #{tpu_custom_call.1} parent=5 // pred_region
      // Predicated region
      $region17: #{tpu_custom_call.1} parent=15 // pred_check
        %p159 = pneg %p50
      $region18: #{tpu_custom_call.1} parent=15 // pred_check_branch
        %161 = sbr.rel (%p159) target = $region20
      $region19: #{tpu_custom_call.1} parent=15 // pred_region
        %s162 = smul.u32 16, %s17
        %p163 = scmp.lt.s32.totalorder %s16, 7
        %s164 = scalar_select %p163, %s16, 7
        %p165 = scmp.lt.s32.totalorder %s162, 15
        %s166 = scalar_select %p165, %s162, 15
        %s167 = smul.addr %s164, 16
        %s168 = sadd.s32 %s166, %s167
        %s169 = smul.addr %s168, 8
        %s170 = scalar_lea.vmem %s0, %s169
        %s171 = smul.u32 16, %s17
      $region20: #{tpu_custom_call.1} parent=15 // pred_fallthru
        _
      // Predicated region
      $region21: #{tpu_custom_call.1} parent=15 // pred_check
        %p172 = pneg %p78
      $region22: #{tpu_custom_call.1} parent=15 // pred_check_branch
        %174 = sbr.rel (%p172) target = $region24
      $region23: #{tpu_custom_call.1} parent=15 // pred_region
        %s175 = smul.u32 16, %s18
        %p176 = scmp.lt.s32.totalorder %s16, 7
        %s177 = scalar_select %p176, %s16, 7
        %p178 = scmp.lt.s32.totalorder %s175, 15
        %s179 = scalar_select %p178, %s175, 15
        %s180 = smul.addr %s177, 16
        %s181 = sadd.s32 %s179, %s180
        %s182 = smul.addr %s181, 8
        %s183 = scalar_lea.vmem %s1, %s182
        %s184 = smul.u32 16, %s18
      $region24: #{tpu_custom_call.1} parent=15 // pred_fallthru
        _
      // Predicated region
      $region25: #{tpu_custom_call.1} parent=15 // pred_check
        %p185 = pneg %p106
      $region26: #{tpu_custom_call.1} parent=15 // pred_check_branch
        %187 = sbr.rel (%p185) target = $region28
      $region27: #{tpu_custom_call.1} parent=15 // pred_region
        %s188 = smul.u32 16, %s18
        %p189 = scmp.lt.s32.totalorder %s16, 7
        %s190 = scalar_select %p189, %s16, 7
        %p191 = scmp.lt.s32.totalorder %s188, 15
        %s192 = scalar_select %p191, %s188, 15
        %s193 = smul.addr %s190, 16
        %s194 = sadd.s32 %s192, %s193
        %s195 = smul.addr %s194, 8
        %s196 = scalar_lea.vmem %s2, %s195
        %s197 = smul.u32 16, %s18
      $region28: #{tpu_custom_call.1} parent=15 // pred_fallthru
        _
    $region16: #{tpu_custom_call.1} parent=5 // pred_fallthru
      _
    %p198 = scmp.le.s32.totalorder 1, %s9
    %p199 = scmp.lt.s32.totalorder %s9, 9
    %p200 = pnand %p198, %p199
    %p201 = pneg %p200
    // Predicated region
    $region29: #{tpu_custom_call.1} parent=5 // pred_check
      _
    $region30: #{tpu_custom_call.1} parent=5 // pred_check_branch
      %203 = sbr.rel (%p200) target = $region32
    $region31: #{tpu_custom_call.1} parent=5 // pred_region
      %s204 = ssub.s32 %s9, 1
      %s205 = smul.u32 16, %s20
      %p206 = scmp.lt.s32.totalorder %s19, 7
      %s207 = scalar_select %p206, %s19, 7
      %p208 = scmp.lt.s32.totalorder %s205, 15
      %s209 = scalar_select %p208, %s205, 15
      %s210 = smul.addr %s207, 16
      %s211 = sadd.s32 %s209, %s210
      %s212 = smul.addr %s211, 8
      %s213 = scalar_lea.vmem %s0, %s212
      %p214 = pneg %p56
      %p215 = pneg %p53
      %s216 = smul.u32 16, %s21
      %p217 = scmp.lt.s32.totalorder %s19, 7
      %s218 = scalar_select %p217, %s19, 7
      %p219 = scmp.lt.s32.totalorder %s216, 15
      %s220 = scalar_select %p219, %s216, 15
      %s221 = smul.addr %s218, 16
      %s222 = sadd.s32 %s220, %s221
      %s223 = smul.addr %s222, 8
      %s224 = scalar_lea.vmem %s1, %s223
      %p225 = pneg %p84
      %p226 = pneg %p81
      %s227 = smul.u32 16, %s21
      %p228 = scmp.lt.s32.totalorder %s19, 7
      %s229 = scalar_select %p228, %s19, 7
      %p230 = scmp.lt.s32.totalorder %s227, 15
      %s231 = scalar_select %p230, %s227, 15
      %s232 = smul.addr %s229, 16
      %s233 = sadd.s32 %s231, %s232
      %s234 = smul.addr %s233, 8
      %s235 = scalar_lea.vmem %s2, %s234
      %p236 = pneg %p112
      %p237 = pneg %p109
      %p238 = pneg %p140
      %p239 = pneg %p137
      %s240 = smul.u32 16, %s20
      %p241 = scmp.lt.s32.totalorder %s19, 7
      %s242 = scalar_select %p241, %s19, 7
      %p243 = scmp.lt.s32.totalorder %s240, 15
      %s244 = scalar_select %p243, %s240, 15
      %s245 = smul.addr %s242, 16
      %s246 = sadd.s32 %s244, %s245
      %s247 = smul.addr %s246, 8
      %s248 = scalar_lea.vmem %s3, %s247
      %s249 = smul.u32 16, %s20
      %p250 = scmp.lt.s32.totalorder %s19, 7
      %s251 = scalar_select %p250, %s19, 7
      %p252 = scmp.lt.s32.totalorder %s249, 15
      %s253 = scalar_select %p252, %s249, 15
      %s254 = smul.addr %s251, 16
      %s255 = sadd.s32 %s253, %s254
      %s256 = smul.addr %s255, 8
      %s257 = scalar_lea.vmem %s0, %s256
      %s258 = smul.u32 16, %s20
      %s259 = smul.u32 16, %s21
      %p260 = scmp.lt.s32.totalorder %s19, 7
      %s261 = scalar_select %p260, %s19, 7
      %p262 = scmp.lt.s32.totalorder %s259, 15
      %s263 = scalar_select %p262, %s259, 15
      %s264 = smul.addr %s261, 16
      %s265 = sadd.s32 %s263, %s264
      %s266 = smul.addr %s265, 8
      %s267 = scalar_lea.vmem %s1, %s266
      %s268 = smul.u32 16, %s21
      %s269 = smul.u32 16, %s21
      %p270 = scmp.lt.s32.totalorder %s19, 7
      %s271 = scalar_select %p270, %s19, 7
      %p272 = scmp.lt.s32.totalorder %s269, 15
      %s273 = scalar_select %p272, %s269, 15
      %s274 = smul.addr %s271, 16
      %s275 = sadd.s32 %s273, %s274
      %s276 = smul.addr %s275, 8
      %s277 = scalar_lea.vmem %s2, %s276
      %s278 = smul.u32 16, %s21
      %s279 = smul.u32 16, %s20
      %p280 = scmp.lt.s32.totalorder %s19, 7
      %s281 = scalar_select %p280, %s19, 7
      %p282 = scmp.lt.s32.totalorder %s279, 15
      %s283 = scalar_select %p282, %s279, 15
      %s284 = smul.addr %s281, 16
      %s285 = sadd.s32 %s283, %s284
      %s286 = smul.addr %s285, 8
      %s287 = scalar_lea.vmem %s3, %s286
      %s288 = smul.u32 16, %s20
      %p289 = scmp.eq.s32.totalorder %s21, 0
      // Predicated region
      $region33: #{tpu_custom_call.1} parent=31 // pred_check
        %p290 = pneg %p289
      $region34: #{tpu_custom_call.1} parent=31 // pred_check_branch
        %292 = sbr.rel (%p290) target = $region36
      $region35: #{tpu_custom_call.1} parent=31 // pred_region
        %vm293 = vcmask 7168
        %294 = vst.msk [vmem:[#allocation2] sm:$0xff] %vm293, -inf
        %295 = vst.msk [vmem:[#allocation2 + $0x8] sm:$0xff] %vm293, -inf
        %296 = vst.msk [vmem:[#allocation2 + $0x10] sm:$0xff] %vm293, -inf
        %297 = vst.msk [vmem:[#allocation2 + $0x18] sm:$0xff] %vm293, -inf
        %298 = vst.msk [vmem:[#allocation2 + $0x20] sm:$0xff] %vm293, -inf
        %299 = vst.msk [vmem:[#allocation2 + $0x28] sm:$0xff] %vm293, -inf
        %300 = vst.msk [vmem:[#allocation2 + $0x30] sm:$0xff] %vm293, -inf
        %301 = vst.msk [vmem:[#allocation2 + $0x38] sm:$0xff] %vm293, -inf
        %302 = vst.msk [vmem:[#allocation2 + $0x40] sm:$0xff] %vm293, -inf
        %303 = vst.msk [vmem:[#allocation2 + $0x48] sm:$0xff] %vm293, -inf
        %304 = vst.msk [vmem:[#allocation2 + $0x50] sm:$0xff] %vm293, -inf
        %305 = vst.msk [vmem:[#allocation2 + $0x58] sm:$0xff] %vm293, -inf
        %306 = vst.msk [vmem:[#allocation2 + $0x60] sm:$0xff] %vm293, -inf
        %307 = vst.msk [vmem:[#allocation2 + $0x68] sm:$0xff] %vm293, -inf
        %308 = vst.msk [vmem:[#allocation2 + $0x70] sm:$0xff] %vm293, -inf
        %309 = vst.msk [vmem:[#allocation2 + $0x78] sm:$0xff] %vm293, -inf
        %310 = vst.msk [vmem:[#allocation3] sm:$0xff] %vm293, 0.0
        %311 = vst.msk [vmem:[#allocation3 + $0x8] sm:$0xff] %vm293, 0.0
        %312 = vst.msk [vmem:[#allocation3 + $0x10] sm:$0xff] %vm293, 0.0
        %313 = vst.msk [vmem:[#allocation3 + $0x18] sm:$0xff] %vm293, 0.0
        %314 = vst.msk [vmem:[#allocation3 + $0x20] sm:$0xff] %vm293, 0.0
        %315 = vst.msk [vmem:[#allocation3 + $0x28] sm:$0xff] %vm293, 0.0
        %316 = vst.msk [vmem:[#allocation3 + $0x30] sm:$0xff] %vm293, 0.0
        %317 = vst.msk [vmem:[#allocation3 + $0x38] sm:$0xff] %vm293, 0.0
        %318 = vst.msk [vmem:[#allocation3 + $0x40] sm:$0xff] %vm293, 0.0
        %319 = vst.msk [vmem:[#allocation3 + $0x48] sm:$0xff] %vm293, 0.0
        %320 = vst.msk [vmem:[#allocation3 + $0x50] sm:$0xff] %vm293, 0.0
        %321 = vst.msk [vmem:[#allocation3 + $0x58] sm:$0xff] %vm293, 0.0
        %322 = vst.msk [vmem:[#allocation3 + $0x60] sm:$0xff] %vm293, 0.0
        %323 = vst.msk [vmem:[#allocation3 + $0x68] sm:$0xff] %vm293, 0.0
        %324 = vst.msk [vmem:[#allocation3 + $0x70] sm:$0xff] %vm293, 0.0
        %325 = vst.msk [vmem:[#allocation3 + $0x78] sm:$0xff] %vm293, 0.0
        %vm326 = vcmask 523264
        %327 = vst.msk [vmem:[#allocation4] sm:$0xff] %vm326, 0.0
        %328 = vst.msk [vmem:[#allocation4 + $0x8] sm:$0xff] %vm326, 0.0
        %329 = vst.msk [vmem:[#allocation4 + $0x10] sm:$0xff] %vm326, 0.0
        %330 = vst.msk [vmem:[#allocation4 + $0x18] sm:$0xff] %vm326, 0.0
        %331 = vst.msk [vmem:[#allocation4 + $0x20] sm:$0xff] %vm326, 0.0
        %332 = vst.msk [vmem:[#allocation4 + $0x28] sm:$0xff] %vm326, 0.0
        %333 = vst.msk [vmem:[#allocation4 + $0x30] sm:$0xff] %vm326, 0.0
        %334 = vst.msk [vmem:[#allocation4 + $0x38] sm:$0xff] %vm326, 0.0
        %335 = vst.msk [vmem:[#allocation4 + $0x40] sm:$0xff] %vm326, 0.0
        %336 = vst.msk [vmem:[#allocation4 + $0x48] sm:$0xff] %vm326, 0.0
        %337 = vst.msk [vmem:[#allocation4 + $0x50] sm:$0xff] %vm326, 0.0
        %338 = vst.msk [vmem:[#allocation4 + $0x58] sm:$0xff] %vm326, 0.0
        %339 = vst.msk [vmem:[#allocation4 + $0x60] sm:$0xff] %vm326, 0.0
        %340 = vst.msk [vmem:[#allocation4 + $0x68] sm:$0xff] %vm326, 0.0
        %341 = vst.msk [vmem:[#allocation4 + $0x70] sm:$0xff] %vm326, 0.0
        %342 = vst.msk [vmem:[#allocation4 + $0x78] sm:$0xff] %vm326, 0.0
      $region36: #{tpu_custom_call.1} parent=31 // pred_fallthru
        _
      %v343 = vld [vmem:[%s257] sm:$0xff]
      %v344 = vld [vmem:[%s257 + $0x8] sm:$0xff]
      %v345 = vld [vmem:[%s257 + $0x10] sm:$0xff]
      %v346 = vld [vmem:[%s257 + $0x18] sm:$0xff]
      %v347 = vld [vmem:[%s257 + $0x20] sm:$0xff]
      %v348 = vld [vmem:[%s257 + $0x28] sm:$0xff]
      %v349 = vld [vmem:[%s257 + $0x30] sm:$0xff]
      %v350 = vld [vmem:[%s257 + $0x38] sm:$0xff]
      %v351 = vld [vmem:[%s257 + $0x40] sm:$0xff]
      %v352 = vld [vmem:[%s257 + $0x48] sm:$0xff]
      %v353 = vld [vmem:[%s257 + $0x50] sm:$0xff]
      %v354 = vld [vmem:[%s257 + $0x58] sm:$0xff]
      %v355 = vld [vmem:[%s257 + $0x60] sm:$0xff]
      %v356 = vld [vmem:[%s257 + $0x68] sm:$0xff]
      %v357 = vld [vmem:[%s257 + $0x70] sm:$0xff]
      %v358 = vld [vmem:[%s257 + $0x78] sm:$0xff]
      %v359 = vld [vmem:[%s267] sm:$0xff]
      %v360 = vld [vmem:[%s267 + $0x8] sm:$0xff]
      %v361 = vld [vmem:[%s267 + $0x10] sm:$0xff]
      %v362 = vld [vmem:[%s267 + $0x18] sm:$0xff]
      %v363 = vld [vmem:[%s267 + $0x20] sm:$0xff]
      %v364 = vld [vmem:[%s267 + $0x28] sm:$0xff]
      %v365 = vld [vmem:[%s267 + $0x30] sm:$0xff]
      %v366 = vld [vmem:[%s267 + $0x38] sm:$0xff]
      %v367 = vld [vmem:[%s267 + $0x40] sm:$0xff]
      %v368 = vld [vmem:[%s267 + $0x48] sm:$0xff]
      %v369 = vld [vmem:[%s267 + $0x50] sm:$0xff]
      %v370 = vld [vmem:[%s267 + $0x58] sm:$0xff]
      %v371 = vld [vmem:[%s267 + $0x60] sm:$0xff]
      %v372 = vld [vmem:[%s267 + $0x68] sm:$0xff]
      %v373 = vld [vmem:[%s267 + $0x70] sm:$0xff]
      %v374 = vld [vmem:[%s267 + $0x78] sm:$0xff]
      %v375 = vld [vmem:[%s277] sm:$0xff]
      %v376 = vld [vmem:[%s277 + $0x8] sm:$0xff]
      %v377 = vld [vmem:[%s277 + $0x10] sm:$0xff]
      %v378 = vld [vmem:[%s277 + $0x18] sm:$0xff]
      %v379 = vld [vmem:[%s277 + $0x20] sm:$0xff]
      %v380 = vld [vmem:[%s277 + $0x28] sm:$0xff]
      %v381 = vld [vmem:[%s277 + $0x30] sm:$0xff]
      %v382 = vld [vmem:[%s277 + $0x38] sm:$0xff]
      %v383 = vld [vmem:[%s277 + $0x40] sm:$0xff]
      %v384 = vld [vmem:[%s277 + $0x48] sm:$0xff]
      %v385 = vld [vmem:[%s277 + $0x50] sm:$0xff]
      %v386 = vld [vmem:[%s277 + $0x58] sm:$0xff]
      %v387 = vld [vmem:[%s277 + $0x60] sm:$0xff]
      %v388 = vld [vmem:[%s277 + $0x68] sm:$0xff]
      %v389 = vld [vmem:[%s277 + $0x70] sm:$0xff]
      %v390 = vld [vmem:[%s277 + $0x78] sm:$0xff]
      %vm391 = vcmask 523264
      %v393 = vsel %vm391, %v343, 0
      %v396 = vsel %vm391, %v344, 0
      %v399 = vsel %vm391, %v345, 0
      %v402 = vsel %vm391, %v346, 0
      %v405 = vsel %vm391, %v347, 0
      %v408 = vsel %vm391, %v348, 0
      %v411 = vsel %vm391, %v349, 0
      %v414 = vsel %vm391, %v350, 0
      %v417 = vsel %vm391, %v351, 0
      %v420 = vsel %vm391, %v352, 0
      %v423 = vsel %vm391, %v353, 0
      %v426 = vsel %vm391, %v354, 0
      %v429 = vsel %vm391, %v355, 0
      %v432 = vsel %vm391, %v356, 0
      %v435 = vsel %vm391, %v357, 0
      %v438 = vsel %vm391, %v358, 0
      %v441 = vsel %vm391, %v359, 0
      %v444 = vsel %vm391, %v360, 0
      %v447 = vsel %vm391, %v361, 0
      %v450 = vsel %vm391, %v362, 0
      %v453 = vsel %vm391, %v363, 0
      %v456 = vsel %vm391, %v364, 0
      %v459 = vsel %vm391, %v365, 0
      %v462 = vsel %vm391, %v366, 0
      %v465 = vsel %vm391, %v367, 0
      %v468 = vsel %vm391, %v368, 0
      %v471 = vsel %vm391, %v369, 0
      %v474 = vsel %vm391, %v370, 0
      %v477 = vsel %vm391, %v371, 0
      %v480 = vsel %vm391, %v372, 0
      %v483 = vsel %vm391, %v373, 0
      %v486 = vsel %vm391, %v374, 0
      %488 = vmatprep.subr.mxu0 0.0
      %489 = vmatpush1.xpose.msra.mxu0 %v486
      %490 = vmatprep.subr.mxu0 0.0
      %491 = vmatpush1.xpose.msra.mxu0 %v483
      %492 = vmatprep.subr.mxu0 0.0
      %493 = vmatpush1.xpose.msra.mxu0 %v480
      %494 = vmatprep.subr.mxu0 0.0
      %495 = vmatpush1.xpose.msra.mxu0 %v477
      %496 = vmatprep.subr.mxu0 0.0
      %497 = vmatpush1.xpose.msra.mxu0 %v474
      %498 = vmatprep.subr.mxu0 0.0
      %499 = vmatpush1.xpose.msra.mxu0 %v471
      %500 = vmatprep.subr.mxu0 0.0
      %501 = vmatpush1.xpose.msra.mxu0 %v468
      %502 = vmatprep.subr.mxu0 0.0
      %503 = vmatpush1.xpose.msra.mxu0 %v465
      %504 = vmatprep.subr.mxu0 0.0
      %505 = vmatpush1.xpose.msra.mxu0 %v462
      %506 = vmatprep.subr.mxu0 0.0
      %507 = vmatpush1.xpose.msra.mxu0 %v459
      %508 = vmatprep.subr.mxu0 0.0
      %509 = vmatpush1.xpose.msra.mxu0 %v456
      %510 = vmatprep.subr.mxu0 0.0
      %511 = vmatpush1.xpose.msra.mxu0 %v453
      %512 = vmatprep.subr.mxu0 0.0
      %513 = vmatpush1.xpose.msra.mxu0 %v450
      %514 = vmatprep.subr.mxu0 0.0
      %515 = vmatpush1.xpose.msra.mxu0 %v447
      %516 = vmatprep.subr.mxu0 0.0
      %517 = vmatpush1.xpose.msra.mxu0 %v444
      %518 = vmatprep.subr.mxu0 0.0
      %519 = vmatpush1.xpose.msra.mxu0 %v441
      %520 = vmatprep.subr.mxu0 0.0
      %521 = vmatpush2.xpose.msra.mxu0 0.0
      %522 = vmatprep.subr.mxu0 0.0
      %523 = vmatpush2.xpose.msra.mxu0 0.0
      %524 = vmatprep.subr.mxu0 0.0
      %525 = vmatpush2.xpose.msra.mxu0 0.0
      %526 = vmatprep.subr.mxu0 0.0
      %527 = vmatpush2.xpose.msra.mxu0 0.0
      %528 = vmatprep.subr.mxu0 0.0
      %529 = vmatpush2.xpose.msra.mxu0 0.0
      %530 = vmatprep.subr.mxu0 0.0
      %531 = vmatpush2.xpose.msra.mxu0 0.0
      %532 = vmatprep.subr.mxu0 0.0
      %533 = vmatpush2.xpose.msra.mxu0 0.0
      %534 = vmatprep.subr.mxu0 0.0
      %535 = vmatpush2.xpose.msra.mxu0 0.0
      %536 = vmatprep.subr.mxu0 0.0
      %537 = vmatpush2.xpose.msra.mxu0 0.0
      %538 = vmatprep.subr.mxu0 0.0
      %539 = vmatpush2.xpose.msra.mxu0 0.0
      %540 = vmatprep.subr.mxu0 0.0
      %541 = vmatpush2.xpose.msra.mxu0 0.0
      %542 = vmatprep.subr.mxu0 0.0
      %543 = vmatpush2.xpose.msra.mxu0 0.0
      %544 = vmatprep.subr.mxu0 0.0
      %545 = vmatpush2.xpose.msra.mxu0 0.0
      %546 = vmatprep.subr.mxu0 0.0
      %547 = vmatpush2.xpose.msra.mxu0 0.0
      %548 = vmatprep.subr.mxu0 0.0
      %549 = vmatpush2.xpose.msra.mxu0 0.0
      %550 = vmatprep.subr.mxu0 0.0
      %551 = vmatpush2.xpose.msra.mxu0 0.0
      %552 = vmatprep.mubr.f32.mxu0 0.0
      %553 = vmatmul.mubr.f32.gmra.mxu0 %v393
      %v554 = vpop.f32.mrf.mxu0
      %v555 = vadd.f32 0.0, %v554
      %v556 = vpop.f32.mrf.mxu0
      %557 = vmatprep.mubr.f32.mxu0 0.0
      %558 = vmatmul.mubr.f32.gmra.mxu0 %v396
      %v559 = vpop.f32.mrf.mxu0
      %v560 = vadd.f32 0.0, %v559
      %v561 = vpop.f32.mrf.mxu0
      %562 = vmatprep.mubr.f32.mxu0 0.0
      %563 = vmatmul.mubr.f32.gmra.mxu0 %v399
      %v564 = vpop.f32.mrf.mxu0
      %v565 = vadd.f32 0.0, %v564
      %v566 = vpop.f32.mrf.mxu0
      %567 = vmatprep.mubr.f32.mxu0 0.0
      %568 = vmatmul.mubr.f32.gmra.mxu0 %v402
      %v569 = vpop.f32.mrf.mxu0
      %v570 = vadd.f32 0.0, %v569
      %v571 = vpop.f32.mrf.mxu0
      %572 = vmatprep.mubr.f32.mxu0 0.0
      %573 = vmatmul.mubr.f32.gmra.mxu0 %v405
      %v574 = vpop.f32.mrf.mxu0
      %v575 = vadd.f32 0.0, %v574
      %v576 = vpop.f32.mrf.mxu0
      %577 = vmatprep.mubr.f32.mxu0 0.0
      %578 = vmatmul.mubr.f32.gmra.mxu0 %v408
      %v579 = vpop.f32.mrf.mxu0
      %v580 = vadd.f32 0.0, %v579
      %v581 = vpop.f32.mrf.mxu0
      %582 = vmatprep.mubr.f32.mxu0 0.0
      %583 = vmatmul.mubr.f32.gmra.mxu0 %v411
      %v584 = vpop.f32.mrf.mxu0
      %v585 = vadd.f32 0.0, %v584
      %v586 = vpop.f32.mrf.mxu0
      %587 = vmatprep.mubr.f32.mxu0 0.0
      %588 = vmatmul.mubr.f32.gmra.mxu0 %v414
      %v589 = vpop.f32.mrf.mxu0
      %v590 = vadd.f32 0.0, %v589
      %v591 = vpop.f32.mrf.mxu0
      %592 = vmatprep.mubr.f32.mxu0 0.0
      %593 = vmatmul.mubr.f32.gmra.mxu0 %v417
      %v594 = vpop.f32.mrf.mxu0
      %v595 = vadd.f32 0.0, %v594
      %v596 = vpop.f32.mrf.mxu0
      %597 = vmatprep.mubr.f32.mxu0 0.0
      %598 = vmatmul.mubr.f32.gmra.mxu0 %v420
      %v599 = vpop.f32.mrf.mxu0
      %v600 = vadd.f32 0.0, %v599
      %v601 = vpop.f32.mrf.mxu0
      %602 = vmatprep.mubr.f32.mxu0 0.0
      %603 = vmatmul.mubr.f32.gmra.mxu0 %v423
      %v604 = vpop.f32.mrf.mxu0
      %v605 = vadd.f32 0.0, %v604
      %v606 = vpop.f32.mrf.mxu0
      %607 = vmatprep.mubr.f32.mxu0 0.0
      %608 = vmatmul.mubr.f32.gmra.mxu0 %v426
      %v609 = vpop.f32.mrf.mxu0
      %v610 = vadd.f32 0.0, %v609
      %v611 = vpop.f32.mrf.mxu0
      %612 = vmatprep.mubr.f32.mxu0 0.0
      %613 = vmatmul.mubr.f32.gmra.mxu0 %v429
      %v614 = vpop.f32.mrf.mxu0
      %v615 = vadd.f32 0.0, %v614
      %v616 = vpop.f32.mrf.mxu0
      %617 = vmatprep.mubr.f32.mxu0 0.0
      %618 = vmatmul.mubr.f32.gmra.mxu0 %v432
      %v619 = vpop.f32.mrf.mxu0
      %v620 = vadd.f32 0.0, %v619
      %v621 = vpop.f32.mrf.mxu0
      %622 = vmatprep.mubr.f32.mxu0 0.0
      %623 = vmatmul.mubr.f32.gmra.mxu0 %v435
      %v624 = vpop.f32.mrf.mxu0
      %v625 = vadd.f32 0.0, %v624
      %v626 = vpop.f32.mrf.mxu0
      %627 = vmatprep.mubr.f32.mxu0 0.0
      %628 = vmatmul.mubr.f32.gmra.mxu0 %v438
      %v629 = vpop.f32.mrf.mxu0
      %v630 = vadd.f32 0.0, %v629
      %v631 = vpop.f32.mrf.mxu0
      %632 = vdwg.mxu0
      %v633 = vmul.f32 %v555, 0.125
      %v634 = vmul.f32 %v560, 0.125
      %v635 = vmul.f32 %v565, 0.125
      %v636 = vmul.f32 %v570, 0.125
      %v637 = vmul.f32 %v575, 0.125
      %v638 = vmul.f32 %v580, 0.125
      %v639 = vmul.f32 %v585, 0.125
      %v640 = vmul.f32 %v590, 0.125
      %v641 = vmul.f32 %v595, 0.125
      %v642 = vmul.f32 %v600, 0.125
      %v643 = vmul.f32 %v605, 0.125
      %v644 = vmul.f32 %v610, 0.125
      %v645 = vmul.f32 %v615, 0.125
      %v646 = vmul.f32 %v620, 0.125
      %v647 = vmul.f32 %v625, 0.125
      %v648 = vmul.f32 %v630, 0.125
      %v649 = vld [vmem:[#allocation2] sm:$0xff]
      %v650 = vld [vmem:[#allocation2 + $0x8] sm:$0xff]
      %v651 = vld [vmem:[#allocation2 + $0x10] sm:$0xff]
      %v652 = vld [vmem:[#allocation2 + $0x18] sm:$0xff]
      %v653 = vld [vmem:[#allocation2 + $0x20] sm:$0xff]
      %v654 = vld [vmem:[#allocation2 + $0x28] sm:$0xff]
      %v655 = vld [vmem:[#allocation2 + $0x30] sm:$0xff]
      %v656 = vld [vmem:[#allocation2 + $0x38] sm:$0xff]
      %v657 = vld [vmem:[#allocation2 + $0x40] sm:$0xff]
      %v658 = vld [vmem:[#allocation2 + $0x48] sm:$0xff]
      %v659 = vld [vmem:[#allocation2 + $0x50] sm:$0xff]
      %v660 = vld [vmem:[#allocation2 + $0x58] sm:$0xff]
      %v661 = vld [vmem:[#allocation2 + $0x60] sm:$0xff]
      %v662 = vld [vmem:[#allocation2 + $0x68] sm:$0xff]
      %v663 = vld [vmem:[#allocation2 + $0x70] sm:$0xff]
      %v664 = vld [vmem:[#allocation2 + $0x78] sm:$0xff]
      %665 = vmax.xlane.f32.xlu0 %v633
      %v666 = vpop.xlane.xlu0 %665
      %667 = vmax.xlane.f32.xlu0 %v634
      %v668 = vpop.xlane.xlu0 %667
      %669 = vmax.xlane.f32.xlu0 %v635
      %v670 = vpop.xlane.xlu0 %669
      %671 = vmax.xlane.f32.xlu0 %v636
      %v672 = vpop.xlane.xlu0 %671
      %673 = vmax.xlane.f32.xlu0 %v637
      %v674 = vpop.xlane.xlu0 %673
      %675 = vmax.xlane.f32.xlu0 %v638
      %v676 = vpop.xlane.xlu0 %675
      %677 = vmax.xlane.f32.xlu0 %v639
      %v678 = vpop.xlane.xlu0 %677
      %679 = vmax.xlane.f32.xlu0 %v640
      %v680 = vpop.xlane.xlu0 %679
      %681 = vmax.xlane.f32.xlu0 %v641
      %v682 = vpop.xlane.xlu0 %681
      %683 = vmax.xlane.f32.xlu0 %v642
      %v684 = vpop.xlane.xlu0 %683
      %685 = vmax.xlane.f32.xlu0 %v643
      %v686 = vpop.xlane.xlu0 %685
      %687 = vmax.xlane.f32.xlu0 %v644
      %v688 = vpop.xlane.xlu0 %687
      %689 = vmax.xlane.f32.xlu0 %v645
      %v690 = vpop.xlane.xlu0 %689
      %691 = vmax.xlane.f32.xlu0 %v646
      %v692 = vpop.xlane.xlu0 %691
      %693 = vmax.xlane.f32.xlu0 %v647
      %v694 = vpop.xlane.xlu0 %693
      %695 = vmax.xlane.f32.xlu0 %v648
      %v696 = vpop.xlane.xlu0 %695
      %v697 = vmax.f32 %v649, %v666
      %v698 = vmax.f32 %v650, %v668
      %v699 = vmax.f32 %v651, %v670
      %v700 = vmax.f32 %v652, %v672
      %v701 = vmax.f32 %v653, %v674
      %v702 = vmax.f32 %v654, %v676
      %v703 = vmax.f32 %v655, %v678
      %v704 = vmax.f32 %v656, %v680
      %v705 = vmax.f32 %v657, %v682
      %v706 = vmax.f32 %v658, %v684
      %v707 = vmax.f32 %v659, %v686
      %v708 = vmax.f32 %v660, %v688
      %v709 = vmax.f32 %v661, %v690
      %v710 = vmax.f32 %v662, %v692
      %v711 = vmax.f32 %v663, %v694
      %v712 = vmax.f32 %v664, %v696
      %v713 = vsub.f32 %v649, %v697
      %v714 = vsub.f32 %v650, %v698
      %v715 = vsub.f32 %v651, %v699
      %v716 = vsub.f32 %v652, %v700
      %v717 = vsub.f32 %v653, %v701
      %v718 = vsub.f32 %v654, %v702
      %v719 = vsub.f32 %v655, %v703
      %v720 = vsub.f32 %v656, %v704
      %v721 = vsub.f32 %v657, %v705
      %v722 = vsub.f32 %v658, %v706
      %v723 = vsub.f32 %v659, %v707
      %v724 = vsub.f32 %v660, %v708
      %v725 = vsub.f32 %v661, %v709
      %v726 = vsub.f32 %v662, %v710
      %v727 = vsub.f32 %v663, %v711
      %v728 = vsub.f32 %v664, %v712
      %v729 = vmul.f32 %v713, 1.442695
      %v730 = vpow.pop %v729
      %v731 = vmul.f32 %v714, 1.442695
      %v732 = vpow.pop %v731
      %v733 = vmul.f32 %v715, 1.442695
      %v734 = vpow.pop %v733
      %v735 = vmul.f32 %v716, 1.442695
      %v736 = vpow.pop %v735
      %v737 = vmul.f32 %v717, 1.442695
      %v738 = vpow.pop %v737
      %v739 = vmul.f32 %v718, 1.442695
      %v740 = vpow.pop %v739
      %v741 = vmul.f32 %v719, 1.442695
      %v742 = vpow.pop %v741
      %v743 = vmul.f32 %v720, 1.442695
      %v744 = vpow.pop %v743
      %v745 = vmul.f32 %v721, 1.442695
      %v746 = vpow.pop %v745
      %v747 = vmul.f32 %v722, 1.442695
      %v748 = vpow.pop %v747
      %v749 = vmul.f32 %v723, 1.442695
      %v750 = vpow.pop %v749
      %v751 = vmul.f32 %v724, 1.442695
      %v752 = vpow.pop %v751
      %v753 = vmul.f32 %v725, 1.442695
      %v754 = vpow.pop %v753
      %v755 = vmul.f32 %v726, 1.442695
      %v756 = vpow.pop %v755
      %v757 = vmul.f32 %v727, 1.442695
      %v758 = vpow.pop %v757
      %v759 = vmul.f32 %v728, 1.442695
      %v760 = vpow.pop %v759
      %762 = vset.pattern.permute.xlu0 0
      %763 = vperm.xlu0 %762, %v697
      %v764 = vpop.permute.xlu0 %763
      %767 = vset.pattern.permute.xlu0 0
      %768 = vperm.xlu0 %767, %v698
      %v769 = vpop.permute.xlu0 %768
      %772 = vset.pattern.permute.xlu0 0
      %773 = vperm.xlu0 %772, %v699
      %v774 = vpop.permute.xlu0 %773
      %777 = vset.pattern.permute.xlu0 0
      %778 = vperm.xlu0 %777, %v700
      %v779 = vpop.permute.xlu0 %778
      %782 = vset.pattern.permute.xlu0 0
      %783 = vperm.xlu0 %782, %v701
      %v784 = vpop.permute.xlu0 %783
      %787 = vset.pattern.permute.xlu0 0
      %788 = vperm.xlu0 %787, %v702
      %v789 = vpop.permute.xlu0 %788
      %792 = vset.pattern.permute.xlu0 0
      %793 = vperm.xlu0 %792, %v703
      %v794 = vpop.permute.xlu0 %793
      %797 = vset.pattern.permute.xlu0 0
      %798 = vperm.xlu0 %797, %v704
      %v799 = vpop.permute.xlu0 %798
      %802 = vset.pattern.permute.xlu0 0
      %803 = vperm.xlu0 %802, %v705
      %v804 = vpop.permute.xlu0 %803
      %807 = vset.pattern.permute.xlu0 0
      %808 = vperm.xlu0 %807, %v706
      %v809 = vpop.permute.xlu0 %808
      %812 = vset.pattern.permute.xlu0 0
      %813 = vperm.xlu0 %812, %v707
      %v814 = vpop.permute.xlu0 %813
      %817 = vset.pattern.permute.xlu0 0
      %818 = vperm.xlu0 %817, %v708
      %v819 = vpop.permute.xlu0 %818
      %822 = vset.pattern.permute.xlu0 0
      %823 = vperm.xlu0 %822, %v709
      %v824 = vpop.permute.xlu0 %823
      %827 = vset.pattern.permute.xlu0 0
      %828 = vperm.xlu0 %827, %v710
      %v829 = vpop.permute.xlu0 %828
      %832 = vset.pattern.permute.xlu0 0
      %833 = vperm.xlu0 %832, %v711
      %v834 = vpop.permute.xlu0 %833
      %837 = vset.pattern.permute.xlu0 0
      %838 = vperm.xlu0 %837, %v712
      %v839 = vpop.permute.xlu0 %838
      %v841 = vsub.f32 %v633, %v764
      %v842 = vsub.f32 %v634, %v769
      %v843 = vsub.f32 %v635, %v774
      %v844 = vsub.f32 %v636, %v779
      %v845 = vsub.f32 %v637, %v784
      %v846 = vsub.f32 %v638, %v789
      %v847 = vsub.f32 %v639, %v794
      %v848 = vsub.f32 %v640, %v799
      %v849 = vsub.f32 %v641, %v804
      %v850 = vsub.f32 %v642, %v809
      %v851 = vsub.f32 %v643, %v814
      %v852 = vsub.f32 %v644, %v819
      %v853 = vsub.f32 %v645, %v824
      %v854 = vsub.f32 %v646, %v829
      %v855 = vsub.f32 %v647, %v834
      %v856 = vsub.f32 %v648, %v839
      %v857 = vmul.f32 %v841, 1.442695
      %v858 = vpow.pop %v857
      %v859 = vmul.f32 %v842, 1.442695
      %v860 = vpow.pop %v859
      %v861 = vmul.f32 %v843, 1.442695
      %v862 = vpow.pop %v861
      %v863 = vmul.f32 %v844, 1.442695
      %v864 = vpow.pop %v863
      %v865 = vmul.f32 %v845, 1.442695
      %v866 = vpow.pop %v865
      %v867 = vmul.f32 %v846, 1.442695
      %v868 = vpow.pop %v867
      %v869 = vmul.f32 %v847, 1.442695
      %v870 = vpow.pop %v869
      %v871 = vmul.f32 %v848, 1.442695
      %v872 = vpow.pop %v871
      %v873 = vmul.f32 %v849, 1.442695
      %v874 = vpow.pop %v873
      %v875 = vmul.f32 %v850, 1.442695
      %v876 = vpow.pop %v875
      %v877 = vmul.f32 %v851, 1.442695
      %v878 = vpow.pop %v877
      %v879 = vmul.f32 %v852, 1.442695
      %v880 = vpow.pop %v879
      %v881 = vmul.f32 %v853, 1.442695
      %v882 = vpow.pop %v881
      %v883 = vmul.f32 %v854, 1.442695
      %v884 = vpow.pop %v883
      %v885 = vmul.f32 %v855, 1.442695
      %v886 = vpow.pop %v885
      %v887 = vmul.f32 %v856, 1.442695
      %v888 = vpow.pop %v887
      %v889 = vld [vmem:[#allocation3] sm:$0xff]
      %v890 = vld [vmem:[#allocation3 + $0x8] sm:$0xff]
      %v891 = vld [vmem:[#allocation3 + $0x10] sm:$0xff]
      %v892 = vld [vmem:[#allocation3 + $0x18] sm:$0xff]
      %v893 = vld [vmem:[#allocation3 + $0x20] sm:$0xff]
      %v894 = vld [vmem:[#allocation3 + $0x28] sm:$0xff]
      %v895 = vld [vmem:[#allocation3 + $0x30] sm:$0xff]
      %v896 = vld [vmem:[#allocation3 + $0x38] sm:$0xff]
      %v897 = vld [vmem:[#allocation3 + $0x40] sm:$0xff]
      %v898 = vld [vmem:[#allocation3 + $0x48] sm:$0xff]
      %v899 = vld [vmem:[#allocation3 + $0x50] sm:$0xff]
      %v900 = vld [vmem:[#allocation3 + $0x58] sm:$0xff]
      %v901 = vld [vmem:[#allocation3 + $0x60] sm:$0xff]
      %v902 = vld [vmem:[#allocation3 + $0x68] sm:$0xff]
      %v903 = vld [vmem:[#allocation3 + $0x70] sm:$0xff]
      %v904 = vld [vmem:[#allocation3 + $0x78] sm:$0xff]
      %v905 = vmul.f32 %v730, %v889
      %v906 = vmul.f32 %v732, %v890
      %v907 = vmul.f32 %v734, %v891
      %v908 = vmul.f32 %v736, %v892
      %v909 = vmul.f32 %v738, %v893
      %v910 = vmul.f32 %v740, %v894
      %v911 = vmul.f32 %v742, %v895
      %v912 = vmul.f32 %v744, %v896
      %v913 = vmul.f32 %v746, %v897
      %v914 = vmul.f32 %v748, %v898
      %v915 = vmul.f32 %v750, %v899
      %v916 = vmul.f32 %v752, %v900
      %v917 = vmul.f32 %v754, %v901
      %v918 = vmul.f32 %v756, %v902
      %v919 = vmul.f32 %v758, %v903
      %v920 = vmul.f32 %v760, %v904
      %921 = vadd.xlane.f32.xlu0 %v858
      %v922 = vpop.xlane.xlu0 %921
      %923 = vadd.xlane.f32.xlu0 %v860
      %v924 = vpop.xlane.xlu0 %923
      %925 = vadd.xlane.f32.xlu0 %v862
      %v926 = vpop.xlane.xlu0 %925
      %927 = vadd.xlane.f32.xlu0 %v864
      %v928 = vpop.xlane.xlu0 %927
      %929 = vadd.xlane.f32.xlu0 %v866
      %v930 = vpop.xlane.xlu0 %929
      %931 = vadd.xlane.f32.xlu0 %v868
      %v932 = vpop.xlane.xlu0 %931
      %933 = vadd.xlane.f32.xlu0 %v870
      %v934 = vpop.xlane.xlu0 %933
      %935 = vadd.xlane.f32.xlu0 %v872
      %v936 = vpop.xlane.xlu0 %935
      %937 = vadd.xlane.f32.xlu0 %v874
      %v938 = vpop.xlane.xlu0 %937
      %939 = vadd.xlane.f32.xlu0 %v876
      %v940 = vpop.xlane.xlu0 %939
      %941 = vadd.xlane.f32.xlu0 %v878
      %v942 = vpop.xlane.xlu0 %941
      %943 = vadd.xlane.f32.xlu0 %v880
      %v944 = vpop.xlane.xlu0 %943
      %945 = vadd.xlane.f32.xlu0 %v882
      %v946 = vpop.xlane.xlu0 %945
      %947 = vadd.xlane.f32.xlu0 %v884
      %v948 = vpop.xlane.xlu0 %947
      %949 = vadd.xlane.f32.xlu0 %v886
      %v950 = vpop.xlane.xlu0 %949
      %951 = vadd.xlane.f32.xlu0 %v888
      %v952 = vpop.xlane.xlu0 %951
      %v953 = vadd.f32 %v905, %v922
      %v954 = vadd.f32 %v906, %v924
      %v955 = vadd.f32 %v907, %v926
      %v956 = vadd.f32 %v908, %v928
      %v957 = vadd.f32 %v909, %v930
      %v958 = vadd.f32 %v910, %v932
      %v959 = vadd.f32 %v911, %v934
      %v960 = vadd.f32 %v912, %v936
      %v961 = vadd.f32 %v913, %v938
      %v962 = vadd.f32 %v914, %v940
      %v963 = vadd.f32 %v915, %v942
      %v964 = vadd.f32 %v916, %v944
      %v965 = vadd.f32 %v917, %v946
      %v966 = vadd.f32 %v918, %v948
      %v967 = vadd.f32 %v919, %v950
      %v968 = vadd.f32 %v920, %v952
      %vm969 = vcmask 7168
      %970 = vst.msk [vmem:[#allocation3] sm:$0xff] %vm969, %v953
      %971 = vst.msk [vmem:[#allocation3 + $0x8] sm:$0xff] %vm969, %v954
      %972 = vst.msk [vmem:[#allocation3 + $0x10] sm:$0xff] %vm969, %v955
      %973 = vst.msk [vmem:[#allocation3 + $0x18] sm:$0xff] %vm969, %v956
      %974 = vst.msk [vmem:[#allocation3 + $0x20] sm:$0xff] %vm969, %v957
      %975 = vst.msk [vmem:[#allocation3 + $0x28] sm:$0xff] %vm969, %v958
      %976 = vst.msk [vmem:[#allocation3 + $0x30] sm:$0xff] %vm969, %v959
      %977 = vst.msk [vmem:[#allocation3 + $0x38] sm:$0xff] %vm969, %v960
      %978 = vst.msk [vmem:[#allocation3 + $0x40] sm:$0xff] %vm969, %v961
      %979 = vst.msk [vmem:[#allocation3 + $0x48] sm:$0xff] %vm969, %v962
      %980 = vst.msk [vmem:[#allocation3 + $0x50] sm:$0xff] %vm969, %v963
      %981 = vst.msk [vmem:[#allocation3 + $0x58] sm:$0xff] %vm969, %v964
      %982 = vst.msk [vmem:[#allocation3 + $0x60] sm:$0xff] %vm969, %v965
      %983 = vst.msk [vmem:[#allocation3 + $0x68] sm:$0xff] %vm969, %v966
      %984 = vst.msk [vmem:[#allocation3 + $0x70] sm:$0xff] %vm969, %v967
      %985 = vst.msk [vmem:[#allocation3 + $0x78] sm:$0xff] %vm969, %v968
      %v986 = vld [vmem:[#allocation4] sm:$0xff]
      %v987 = vld [vmem:[#allocation4 + $0x8] sm:$0xff]
      %v988 = vld [vmem:[#allocation4 + $0x10] sm:$0xff]
      %v989 = vld [vmem:[#allocation4 + $0x18] sm:$0xff]
      %v990 = vld [vmem:[#allocation4 + $0x20] sm:$0xff]
      %v991 = vld [vmem:[#allocation4 + $0x28] sm:$0xff]
      %v992 = vld [vmem:[#allocation4 + $0x30] sm:$0xff]
      %v993 = vld [vmem:[#allocation4 + $0x38] sm:$0xff]
      %v994 = vld [vmem:[#allocation4 + $0x40] sm:$0xff]
      %v995 = vld [vmem:[#allocation4 + $0x48] sm:$0xff]
      %v996 = vld [vmem:[#allocation4 + $0x50] sm:$0xff]
      %v997 = vld [vmem:[#allocation4 + $0x58] sm:$0xff]
      %v998 = vld [vmem:[#allocation4 + $0x60] sm:$0xff]
      %v999 = vld [vmem:[#allocation4 + $0x68] sm:$0xff]
      %v1000 = vld [vmem:[#allocation4 + $0x70] sm:$0xff]
      %v1001 = vld [vmem:[#allocation4 + $0x78] sm:$0xff]
      %1003 = vset.pattern.permute.xlu0 0
      %1004 = vperm.xlu0 %1003, %v730
      %v1005 = vpop.permute.xlu0 %1004
      %1008 = vset.pattern.permute.xlu0 0
      %1009 = vperm.xlu0 %1008, %v732
      %v1010 = vpop.permute.xlu0 %1009
      %1013 = vset.pattern.permute.xlu0 0
      %1014 = vperm.xlu0 %1013, %v734
      %v1015 = vpop.permute.xlu0 %1014
      %1018 = vset.pattern.permute.xlu0 0
      %1019 = vperm.xlu0 %1018, %v736
      %v1020 = vpop.permute.xlu0 %1019
      %1023 = vset.pattern.permute.xlu0 0
      %1024 = vperm.xlu0 %1023, %v738
      %v1025 = vpop.permute.xlu0 %1024
      %1028 = vset.pattern.permute.xlu0 0
      %1029 = vperm.xlu0 %1028, %v740
      %v1030 = vpop.permute.xlu0 %1029
      %1033 = vset.pattern.permute.xlu0 0
      %1034 = vperm.xlu0 %1033, %v742
      %v1035 = vpop.permute.xlu0 %1034
      %1038 = vset.pattern.permute.xlu0 0
      %1039 = vperm.xlu0 %1038, %v744
      %v1040 = vpop.permute.xlu0 %1039
      %1043 = vset.pattern.permute.xlu0 0
      %1044 = vperm.xlu0 %1043, %v746
      %v1045 = vpop.permute.xlu0 %1044
      %1048 = vset.pattern.permute.xlu0 0
      %1049 = vperm.xlu0 %1048, %v748
      %v1050 = vpop.permute.xlu0 %1049
      %1053 = vset.pattern.permute.xlu0 0
      %1054 = vperm.xlu0 %1053, %v750
      %v1055 = vpop.permute.xlu0 %1054
      %1058 = vset.pattern.permute.xlu0 0
      %1059 = vperm.xlu0 %1058, %v752
      %v1060 = vpop.permute.xlu0 %1059
      %1063 = vset.pattern.permute.xlu0 0
      %1064 = vperm.xlu0 %1063, %v754
      %v1065 = vpop.permute.xlu0 %1064
      %1068 = vset.pattern.permute.xlu0 0
      %1069 = vperm.xlu0 %1068, %v756
      %v1070 = vpop.permute.xlu0 %1069
      %1073 = vset.pattern.permute.xlu0 0
      %1074 = vperm.xlu0 %1073, %v758
      %v1075 = vpop.permute.xlu0 %1074
      %1078 = vset.pattern.permute.xlu0 0
      %1079 = vperm.xlu0 %1078, %v760
      %v1080 = vpop.permute.xlu0 %1079
      %v1082 = vmul.f32 %v1005, %v986
      %v1083 = vmul.f32 %v1010, %v987
      %v1084 = vmul.f32 %v1015, %v988
      %v1085 = vmul.f32 %v1020, %v989
      %v1086 = vmul.f32 %v1025, %v990
      %v1087 = vmul.f32 %v1030, %v991
      %v1088 = vmul.f32 %v1035, %v992
      %v1089 = vmul.f32 %v1040, %v993
      %v1090 = vmul.f32 %v1045, %v994
      %v1091 = vmul.f32 %v1050, %v995
      %v1092 = vmul.f32 %v1055, %v996
      %v1093 = vmul.f32 %v1060, %v997
      %v1094 = vmul.f32 %v1065, %v998
      %v1095 = vmul.f32 %v1070, %v999
      %v1096 = vmul.f32 %v1075, %v1000
      %v1097 = vmul.f32 %v1080, %v1001
      %1098 = vmatprep.subr.mxu0 0.0
      %1099 = vmatpush1.msra.mxu0 %v390
      %1100 = vmatprep.subr.mxu0 0.0
      %1101 = vmatpush1.msra.mxu0 %v389
      %1102 = vmatprep.subr.mxu0 0.0
      %1103 = vmatpush1.msra.mxu0 %v388
      %1104 = vmatprep.subr.mxu0 0.0
      %1105 = vmatpush1.msra.mxu0 %v387
      %1106 = vmatprep.subr.mxu0 0.0
      %1107 = vmatpush1.msra.mxu0 %v386
      %1108 = vmatprep.subr.mxu0 0.0
      %1109 = vmatpush1.msra.mxu0 %v385
      %1110 = vmatprep.subr.mxu0 0.0
      %1111 = vmatpush1.msra.mxu0 %v384
      %1112 = vmatprep.subr.mxu0 0.0
      %1113 = vmatpush1.msra.mxu0 %v383
      %1114 = vmatprep.subr.mxu0 0.0
      %1115 = vmatpush1.msra.mxu0 %v382
      %1116 = vmatprep.subr.mxu0 0.0
      %1117 = vmatpush1.msra.mxu0 %v381
      %1118 = vmatprep.subr.mxu0 0.0
      %1119 = vmatpush1.msra.mxu0 %v380
      %1120 = vmatprep.subr.mxu0 0.0
      %1121 = vmatpush1.msra.mxu0 %v379
      %1122 = vmatprep.subr.mxu0 0.0
      %1123 = vmatpush1.msra.mxu0 %v378
      %1124 = vmatprep.subr.mxu0 0.0
      %1125 = vmatpush1.msra.mxu0 %v377
      %1126 = vmatprep.subr.mxu0 0.0
      %1127 = vmatpush1.msra.mxu0 %v376
      %1128 = vmatprep.subr.mxu0 0.0
      %1129 = vmatpush1.msra.mxu0 %v375
      %1130 = vmatprep.subr.mxu0 0.0
      %1131 = vmatpush2.msra.mxu0 0.0
      %1132 = vmatprep.subr.mxu0 0.0
      %1133 = vmatpush2.msra.mxu0 0.0
      %1134 = vmatprep.subr.mxu0 0.0
      %1135 = vmatpush2.msra.mxu0 0.0
      %1136 = vmatprep.subr.mxu0 0.0
      %1137 = vmatpush2.msra.mxu0 0.0
      %1138 = vmatprep.subr.mxu0 0.0
      %1139 = vmatpush2.msra.mxu0 0.0
      %1140 = vmatprep.subr.mxu0 0.0
      %1141 = vmatpush2.msra.mxu0 0.0
      %1142 = vmatprep.subr.mxu0 0.0
      %1143 = vmatpush2.msra.mxu0 0.0
      %1144 = vmatprep.subr.mxu0 0.0
      %1145 = vmatpush2.msra.mxu0 0.0
      %1146 = vmatprep.subr.mxu0 0.0
      %1147 = vmatpush2.msra.mxu0 0.0
      %1148 = vmatprep.subr.mxu0 0.0
      %1149 = vmatpush2.msra.mxu0 0.0
      %1150 = vmatprep.subr.mxu0 0.0
      %1151 = vmatpush2.msra.mxu0 0.0
      %1152 = vmatprep.subr.mxu0 0.0
      %1153 = vmatpush2.msra.mxu0 0.0
      %1154 = vmatprep.subr.mxu0 0.0
      %1155 = vmatpush2.msra.mxu0 0.0
      %1156 = vmatprep.subr.mxu0 0.0
      %1157 = vmatpush2.msra.mxu0 0.0
      %1158 = vmatprep.subr.mxu0 0.0
      %1159 = vmatpush2.msra.mxu0 0.0
      %1160 = vmatprep.subr.mxu0 0.0
      %1161 = vmatpush2.msra.mxu0 0.0
      %1162 = vmatprep.mubr.f32.mxu0 0.0
      %1163 = vmatmul.mubr.f32.gmra.mxu0 %v858
      %v1164 = vpop.f32.mrf.mxu0
      %v1165 = vadd.f32 0.0, %v1164
      %v1166 = vpop.f32.mrf.mxu0
      %1167 = vmatprep.mubr.f32.mxu0 0.0
      %1168 = vmatmul.mubr.f32.gmra.mxu0 %v860
      %v1169 = vpop.f32.mrf.mxu0
      %v1170 = vadd.f32 0.0, %v1169
      %v1171 = vpop.f32.mrf.mxu0
      %1172 = vmatprep.mubr.f32.mxu0 0.0
      %1173 = vmatmul.mubr.f32.gmra.mxu0 %v862
      %v1174 = vpop.f32.mrf.mxu0
      %v1175 = vadd.f32 0.0, %v1174
      %v1176 = vpop.f32.mrf.mxu0
      %1177 = vmatprep.mubr.f32.mxu0 0.0
      %1178 = vmatmul.mubr.f32.gmra.mxu0 %v864
      %v1179 = vpop.f32.mrf.mxu0
      %v1180 = vadd.f32 0.0, %v1179
      %v1181 = vpop.f32.mrf.mxu0
      %1182 = vmatprep.mubr.f32.mxu0 0.0
      %1183 = vmatmul.mubr.f32.gmra.mxu0 %v866
      %v1184 = vpop.f32.mrf.mxu0
      %v1185 = vadd.f32 0.0, %v1184
      %v1186 = vpop.f32.mrf.mxu0
      %1187 = vmatprep.mubr.f32.mxu0 0.0
      %1188 = vmatmul.mubr.f32.gmra.mxu0 %v868
      %v1189 = vpop.f32.mrf.mxu0
      %v1190 = vadd.f32 0.0, %v1189
      %v1191 = vpop.f32.mrf.mxu0
      %1192 = vmatprep.mubr.f32.mxu0 0.0
      %1193 = vmatmul.mubr.f32.gmra.mxu0 %v870
      %v1194 = vpop.f32.mrf.mxu0
      %v1195 = vadd.f32 0.0, %v1194
      %v1196 = vpop.f32.mrf.mxu0
      %1197 = vmatprep.mubr.f32.mxu0 0.0
      %1198 = vmatmul.mubr.f32.gmra.mxu0 %v872
      %v1199 = vpop.f32.mrf.mxu0
      %v1200 = vadd.f32 0.0, %v1199
      %v1201 = vpop.f32.mrf.mxu0
      %1202 = vmatprep.mubr.f32.mxu0 0.0
      %1203 = vmatmul.mubr.f32.gmra.mxu0 %v874
      %v1204 = vpop.f32.mrf.mxu0
      %v1205 = vadd.f32 0.0, %v1204
      %v1206 = vpop.f32.mrf.mxu0
      %1207 = vmatprep.mubr.f32.mxu0 0.0
      %1208 = vmatmul.mubr.f32.gmra.mxu0 %v876
      %v1209 = vpop.f32.mrf.mxu0
      %v1210 = vadd.f32 0.0, %v1209
      %v1211 = vpop.f32.mrf.mxu0
      %1212 = vmatprep.mubr.f32.mxu0 0.0
      %1213 = vmatmul.mubr.f32.gmra.mxu0 %v878
      %v1214 = vpop.f32.mrf.mxu0
      %v1215 = vadd.f32 0.0, %v1214
      %v1216 = vpop.f32.mrf.mxu0
      %1217 = vmatprep.mubr.f32.mxu0 0.0
      %1218 = vmatmul.mubr.f32.gmra.mxu0 %v880
      %v1219 = vpop.f32.mrf.mxu0
      %v1220 = vadd.f32 0.0, %v1219
      %v1221 = vpop.f32.mrf.mxu0
      %1222 = vmatprep.mubr.f32.mxu0 0.0
      %1223 = vmatmul.mubr.f32.gmra.mxu0 %v882
      %v1224 = vpop.f32.mrf.mxu0
      %v1225 = vadd.f32 0.0, %v1224
      %v1226 = vpop.f32.mrf.mxu0
      %1227 = vmatprep.mubr.f32.mxu0 0.0
      %1228 = vmatmul.mubr.f32.gmra.mxu0 %v884
      %v1229 = vpop.f32.mrf.mxu0
      %v1230 = vadd.f32 0.0, %v1229
      %v1231 = vpop.f32.mrf.mxu0
      %1232 = vmatprep.mubr.f32.mxu0 0.0
      %1233 = vmatmul.mubr.f32.gmra.mxu0 %v886
      %v1234 = vpop.f32.mrf.mxu0
      %v1235 = vadd.f32 0.0, %v1234
      %v1236 = vpop.f32.mrf.mxu0
      %1237 = vmatprep.mubr.f32.mxu0 0.0
      %1238 = vmatmul.mubr.f32.gmra.mxu0 %v888
      %v1239 = vpop.f32.mrf.mxu0
      %v1240 = vadd.f32 0.0, %v1239
      %v1241 = vpop.f32.mrf.mxu0
      %1242 = vdwg.mxu0
      %v1243 = vadd.f32 %v1082, %v1165
      %v1244 = vadd.f32 %v1083, %v1170
      %v1245 = vadd.f32 %v1084, %v1175
      %v1246 = vadd.f32 %v1085, %v1180
      %v1247 = vadd.f32 %v1086, %v1185
      %v1248 = vadd.f32 %v1087, %v1190
      %v1249 = vadd.f32 %v1088, %v1195
      %v1250 = vadd.f32 %v1089, %v1200
      %v1251 = vadd.f32 %v1090, %v1205
      %v1252 = vadd.f32 %v1091, %v1210
      %v1253 = vadd.f32 %v1092, %v1215
      %v1254 = vadd.f32 %v1093, %v1220
      %v1255 = vadd.f32 %v1094, %v1225
      %v1256 = vadd.f32 %v1095, %v1230
      %v1257 = vadd.f32 %v1096, %v1235
      %v1258 = vadd.f32 %v1097, %v1240
      %1259 = vst.msk [vmem:[#allocation4] sm:$0xff] %vm391, %v1243
      %1260 = vst.msk [vmem:[#allocation4 + $0x8] sm:$0xff] %vm391, %v1244
      %1261 = vst.msk [vmem:[#allocation4 + $0x10] sm:$0xff] %vm391, %v1245
      %1262 = vst.msk [vmem:[#allocation4 + $0x18] sm:$0xff] %vm391, %v1246
      %1263 = vst.msk [vmem:[#allocation4 + $0x20] sm:$0xff] %vm391, %v1247
      %1264 = vst.msk [vmem:[#allocation4 + $0x28] sm:$0xff] %vm391, %v1248
      %1265 = vst.msk [vmem:[#allocation4 + $0x30] sm:$0xff] %vm391, %v1249
      %1266 = vst.msk [vmem:[#allocation4 + $0x38] sm:$0xff] %vm391, %v1250
      %1267 = vst.msk [vmem:[#allocation4 + $0x40] sm:$0xff] %vm391, %v1251
      %1268 = vst.msk [vmem:[#allocation4 + $0x48] sm:$0xff] %vm391, %v1252
      %1269 = vst.msk [vmem:[#allocation4 + $0x50] sm:$0xff] %vm391, %v1253
      %1270 = vst.msk [vmem:[#allocation4 + $0x58] sm:$0xff] %vm391, %v1254
      %1271 = vst.msk [vmem:[#allocation4 + $0x60] sm:$0xff] %vm391, %v1255
      %1272 = vst.msk [vmem:[#allocation4 + $0x68] sm:$0xff] %vm391, %v1256
      %1273 = vst.msk [vmem:[#allocation4 + $0x70] sm:$0xff] %vm391, %v1257
      %1274 = vst.msk [vmem:[#allocation4 + $0x78] sm:$0xff] %vm391, %v1258
      %1275 = vst.msk [vmem:[#allocation2] sm:$0xff] %vm969, %v697
      %1276 = vst.msk [vmem:[#allocation2 + $0x8] sm:$0xff] %vm969, %v698
      %1277 = vst.msk [vmem:[#allocation2 + $0x10] sm:$0xff] %vm969, %v699
      %1278 = vst.msk [vmem:[#allocation2 + $0x18] sm:$0xff] %vm969, %v700
      %1279 = vst.msk [vmem:[#allocation2 + $0x20] sm:$0xff] %vm969, %v701
      %1280 = vst.msk [vmem:[#allocation2 + $0x28] sm:$0xff] %vm969, %v702
      %1281 = vst.msk [vmem:[#allocation2 + $0x30] sm:$0xff] %vm969, %v703
      %1282 = vst.msk [vmem:[#allocation2 + $0x38] sm:$0xff] %vm969, %v704
      %1283 = vst.msk [vmem:[#allocation2 + $0x40] sm:$0xff] %vm969, %v705
      %1284 = vst.msk [vmem:[#allocation2 + $0x48] sm:$0xff] %vm969, %v706
      %1285 = vst.msk [vmem:[#allocation2 + $0x50] sm:$0xff] %vm969, %v707
      %1286 = vst.msk [vmem:[#allocation2 + $0x58] sm:$0xff] %vm969, %v708
      %1287 = vst.msk [vmem:[#allocation2 + $0x60] sm:$0xff] %vm969, %v709
      %1288 = vst.msk [vmem:[#allocation2 + $0x68] sm:$0xff] %vm969, %v710
      %1289 = vst.msk [vmem:[#allocation2 + $0x70] sm:$0xff] %vm969, %v711
      %1290 = vst.msk [vmem:[#allocation2 + $0x78] sm:$0xff] %vm969, %v712
      // Predicated region
      $region37: #{tpu_custom_call.1} parent=31 // pred_check
        %p1291 = pneg %p289
      $region38: #{tpu_custom_call.1} parent=31 // pred_check_branch
        %1293 = sbr.rel (%p1291) target = $region40
      $region39: #{tpu_custom_call.1} parent=31 // pred_region
        %v1294 = vld [vmem:[#allocation4] sm:$0xff]
        %v1295 = vld [vmem:[#allocation4 + $0x8] sm:$0xff]
        %v1296 = vld [vmem:[#allocation4 + $0x10] sm:$0xff]
        %v1297 = vld [vmem:[#allocation4 + $0x18] sm:$0xff]
        %v1298 = vld [vmem:[#allocation4 + $0x20] sm:$0xff]
        %v1299 = vld [vmem:[#allocation4 + $0x28] sm:$0xff]
        %v1300 = vld [vmem:[#allocation4 + $0x30] sm:$0xff]
        %v1301 = vld [vmem:[#allocation4 + $0x38] sm:$0xff]
        %v1302 = vld [vmem:[#allocation4 + $0x40] sm:$0xff]
        %v1303 = vld [vmem:[#allocation4 + $0x48] sm:$0xff]
        %v1304 = vld [vmem:[#allocation4 + $0x50] sm:$0xff]
        %v1305 = vld [vmem:[#allocation4 + $0x58] sm:$0xff]
        %v1306 = vld [vmem:[#allocation4 + $0x60] sm:$0xff]
        %v1307 = vld [vmem:[#allocation4 + $0x68] sm:$0xff]
        %v1308 = vld [vmem:[#allocation4 + $0x70] sm:$0xff]
        %v1309 = vld [vmem:[#allocation4 + $0x78] sm:$0xff]
        %v1310 = vld [vmem:[#allocation3] sm:$0xff]
        %v1311 = vld [vmem:[#allocation3 + $0x8] sm:$0xff]
        %v1312 = vld [vmem:[#allocation3 + $0x10] sm:$0xff]
        %v1313 = vld [vmem:[#allocation3 + $0x18] sm:$0xff]
        %v1314 = vld [vmem:[#allocation3 + $0x20] sm:$0xff]
        %v1315 = vld [vmem:[#allocation3 + $0x28] sm:$0xff]
        %v1316 = vld [vmem:[#allocation3 + $0x30] sm:$0xff]
        %v1317 = vld [vmem:[#allocation3 + $0x38] sm:$0xff]
        %v1318 = vld [vmem:[#allocation3 + $0x40] sm:$0xff]
        %v1319 = vld [vmem:[#allocation3 + $0x48] sm:$0xff]
        %v1320 = vld [vmem:[#allocation3 + $0x50] sm:$0xff]
        %v1321 = vld [vmem:[#allocation3 + $0x58] sm:$0xff]
        %v1322 = vld [vmem:[#allocation3 + $0x60] sm:$0xff]
        %v1323 = vld [vmem:[#allocation3 + $0x68] sm:$0xff]
        %v1324 = vld [vmem:[#allocation3 + $0x70] sm:$0xff]
        %v1325 = vld [vmem:[#allocation3 + $0x78] sm:$0xff]
        %1327 = vset.pattern.permute.xlu0 0
        %1328 = vperm.xlu0 %1327, %v1310
        %v1329 = vpop.permute.xlu0 %1328
        %1332 = vset.pattern.permute.xlu0 0
        %1333 = vperm.xlu0 %1332, %v1311
        %v1334 = vpop.permute.xlu0 %1333
        %1337 = vset.pattern.permute.xlu0 0
        %1338 = vperm.xlu0 %1337, %v1312
        %v1339 = vpop.permute.xlu0 %1338
        %1342 = vset.pattern.permute.xlu0 0
        %1343 = vperm.xlu0 %1342, %v1313
        %v1344 = vpop.permute.xlu0 %1343
        %1347 = vset.pattern.permute.xlu0 0
        %1348 = vperm.xlu0 %1347, %v1314
        %v1349 = vpop.permute.xlu0 %1348
        %1352 = vset.pattern.permute.xlu0 0
        %1353 = vperm.xlu0 %1352, %v1315
        %v1354 = vpop.permute.xlu0 %1353
        %1357 = vset.pattern.permute.xlu0 0
        %1358 = vperm.xlu0 %1357, %v1316
        %v1359 = vpop.permute.xlu0 %1358
        %1362 = vset.pattern.permute.xlu0 0
        %1363 = vperm.xlu0 %1362, %v1317
        %v1364 = vpop.permute.xlu0 %1363
        %1367 = vset.pattern.permute.xlu0 0
        %1368 = vperm.xlu0 %1367, %v1318
        %v1369 = vpop.permute.xlu0 %1368
        %1372 = vset.pattern.permute.xlu0 0
        %1373 = vperm.xlu0 %1372, %v1319
        %v1374 = vpop.permute.xlu0 %1373
        %1377 = vset.pattern.permute.xlu0 0
        %1378 = vperm.xlu0 %1377, %v1320
        %v1379 = vpop.permute.xlu0 %1378
        %1382 = vset.pattern.permute.xlu0 0
        %1383 = vperm.xlu0 %1382, %v1321
        %v1384 = vpop.permute.xlu0 %1383
        %1387 = vset.pattern.permute.xlu0 0
        %1388 = vperm.xlu0 %1387, %v1322
        %v1389 = vpop.permute.xlu0 %1388
        %1392 = vset.pattern.permute.xlu0 0
        %1393 = vperm.xlu0 %1392, %v1323
        %v1394 = vpop.permute.xlu0 %1393
        %1397 = vset.pattern.permute.xlu0 0
        %1398 = vperm.xlu0 %1397, %v1324
        %v1399 = vpop.permute.xlu0 %1398
        %1402 = vset.pattern.permute.xlu0 0
        %1403 = vperm.xlu0 %1402, %v1325
        %v1404 = vpop.permute.xlu0 %1403
        %v1406 = vrcp.pop %v1329
        %v1407 = vmul.f32 %v1294, %v1406
        %v1408 = vrcp.pop %v1334
        %v1409 = vmul.f32 %v1295, %v1408
        %v1410 = vrcp.pop %v1339
        %v1411 = vmul.f32 %v1296, %v1410
        %v1412 = vrcp.pop %v1344
        %v1413 = vmul.f32 %v1297, %v1412
        %v1414 = vrcp.pop %v1349
        %v1415 = vmul.f32 %v1298, %v1414
        %v1416 = vrcp.pop %v1354
        %v1417 = vmul.f32 %v1299, %v1416
        %v1418 = vrcp.pop %v1359
        %v1419 = vmul.f32 %v1300, %v1418
        %v1420 = vrcp.pop %v1364
        %v1421 = vmul.f32 %v1301, %v1420
        %v1422 = vrcp.pop %v1369
        %v1423 = vmul.f32 %v1302, %v1422
        %v1424 = vrcp.pop %v1374
        %v1425 = vmul.f32 %v1303, %v1424
        %v1426 = vrcp.pop %v1379
        %v1427 = vmul.f32 %v1304, %v1426
        %v1428 = vrcp.pop %v1384
        %v1429 = vmul.f32 %v1305, %v1428
        %v1430 = vrcp.pop %v1389
        %v1431 = vmul.f32 %v1306, %v1430
        %v1432 = vrcp.pop %v1394
        %v1433 = vmul.f32 %v1307, %v1432
        %v1434 = vrcp.pop %v1399
        %v1435 = vmul.f32 %v1308, %v1434
        %v1436 = vrcp.pop %v1404
        %v1437 = vmul.f32 %v1309, %v1436
        %1438 = vst.msk [vmem:[%s287] sm:$0xff] %vm391, %v1407
        %1439 = vst.msk [vmem:[%s287 + $0x8] sm:$0xff] %vm391, %v1409
        %1440 = vst.msk [vmem:[%s287 + $0x10] sm:$0xff] %vm391, %v1411
        %1441 = vst.msk [vmem:[%s287 + $0x18] sm:$0xff] %vm391, %v1413
        %1442 = vst.msk [vmem:[%s287 + $0x20] sm:$0xff] %vm391, %v1415
        %1443 = vst.msk [vmem:[%s287 + $0x28] sm:$0xff] %vm391, %v1417
        %1444 = vst.msk [vmem:[%s287 + $0x30] sm:$0xff] %vm391, %v1419
        %1445 = vst.msk [vmem:[%s287 + $0x38] sm:$0xff] %vm391, %v1421
        %1446 = vst.msk [vmem:[%s287 + $0x40] sm:$0xff] %vm391, %v1423
        %1447 = vst.msk [vmem:[%s287 + $0x48] sm:$0xff] %vm391, %v1425
        %1448 = vst.msk [vmem:[%s287 + $0x50] sm:$0xff] %vm391, %v1427
        %1449 = vst.msk [vmem:[%s287 + $0x58] sm:$0xff] %vm391, %v1429
        %1450 = vst.msk [vmem:[%s287 + $0x60] sm:$0xff] %vm391, %v1431
        %1451 = vst.msk [vmem:[%s287 + $0x68] sm:$0xff] %vm391, %v1433
        %1452 = vst.msk [vmem:[%s287 + $0x70] sm:$0xff] %vm391, %v1435
        %1453 = vst.msk [vmem:[%s287 + $0x78] sm:$0xff] %vm391, %v1437
      $region40: #{tpu_custom_call.1} parent=31 // pred_fallthru
        _
      %s1454 = smul.u32 16, %s20
      %p1455 = scmp.lt.s32.totalorder %s19, 7
      %s1456 = scalar_select %p1455, %s19, 7
      %p1457 = scmp.lt.s32.totalorder %s1454, 15
      %s1458 = scalar_select %p1457, %s1454, 15
      %s1459 = smul.addr %s1456, 16
      %s1460 = sadd.s32 %s1458, %s1459
      %s1461 = smul.addr %s1460, 8
      %s1462 = scalar_lea.vmem %s3, %s1461
      // Predicated region
      $region41: #{tpu_custom_call.1} parent=31 // pred_check
        %p1463 = pneg %p137
      $region42: #{tpu_custom_call.1} parent=31 // pred_check_branch
        %1465 = sbr.rel (%p1463) target = $region44
      $region43: #{tpu_custom_call.1} parent=31 // pred_region
        %s1466 = smul.u32 16, %s20
      $region44: #{tpu_custom_call.1} parent=31 // pred_fallthru
        _
    $region32: #{tpu_custom_call.1} parent=5 // pred_fallthru
      _
    %p1467 = scmp.le.s32.totalorder 2, %s9
    // Predicated region
    $region45: #{tpu_custom_call.1} parent=5 // pred_check
      %p1468 = pneg %p1467
    $region46: #{tpu_custom_call.1} parent=5 // pred_check_branch
      %1470 = sbr.rel (%p1468) target = $region48
    $region47: #{tpu_custom_call.1} parent=5 // pred_region
      %s1471 = ssub.s32 %s9, 2
      // Predicated region
      $region49: #{tpu_custom_call.1} parent=47 // pred_check
        %p1472 = pneg %p143
      $region50: #{tpu_custom_call.1} parent=47 // pred_check_branch
        %1474 = sbr.rel (%p1472) target = $region52
      $region51: #{tpu_custom_call.1} parent=47 // pred_region
        %s1475 = smul.u32 16, %s23
        %p1476 = scmp.lt.s32.totalorder %s22, 7
        %s1477 = scalar_select %p1476, %s22, 7
        %p1478 = scmp.lt.s32.totalorder %s1475, 15
        %s1479 = scalar_select %p1478, %s1475, 15
        %s1480 = smul.addr %s1477, 16
        %s1481 = sadd.s32 %s1479, %s1480
        %s1482 = smul.addr %s1481, 8
        %s1483 = scalar_lea.vmem %s3, %s1482
      $region52: #{tpu_custom_call.1} parent=47 // pred_fallthru
        _
    $region48: #{tpu_custom_call.1} parent=5 // pred_fallthru
      _
  $region6: #{tpu_custom_call.1} parent=0 // loop_footer
    %s13 = sadd.s32 1, %s9
  $region7: #{tpu_custom_call.1} parent=0 // loop_footer_branch
    %8 = sbr.rel target = $region3
  $region8: #{tpu_custom_call.1} parent=0 // loop_exit
    _

</llo_original>
